<compile_context>
chip_gen: v6e
topology: v6e:2x2x1
jax: 0.10.0
libtpu: 0.0.40
codegen_flags: <defaults>
</compile_context>

<pallas_src>
import jax
import jax.numpy as jnp
from jax.experimental import pallas as pl
from jax.experimental.pallas import tpu as pltpu

DARTS_SPACE = (
    "none", "max_pool_3x3", "avg_pool_3x3", "skip_connect",
    "sep_conv_3x3", "sep_conv_5x5", "dil_conv_3x3", "dil_conv_5x5",
)

BN_EPS = 1e-5
TAP_DTYPE = jnp.bfloat16

# Shared tap-offset sets (stride 1).  Offsets are relative to the output pixel.
OFFS_3x3 = tuple((di, dj) for di in (-1, 0, 1) for dj in (-1, 0, 1))
OFFS_A = tuple((di, dj) for di in (-2, -1, 0, 1, 2) for dj in (-2, -1, 0, 1, 2))
OFFS_B = tuple((di, dj) for di in (-4, -2, 0, 2, 4) for dj in (-4, -2, 0, 2, 4))


# ---------------------------------------------------------------------------
# Small helpers
# ---------------------------------------------------------------------------

def _round_up(x, m):
  return (x + m - 1) // m * m


def _cdiv(a, b):
  return (a + b - 1) // b


def _vmem_limit_bytes():
  """Explicit scoped-VMEM budget: ~3/4 of physical, clamped to sane bounds."""
  cap = 64 * 1024 * 1024
  try:
    info = pltpu.get_tpu_info()
    cap = int(getattr(info, "vmem_capacity_bytes", cap)) or cap
  except Exception:
    pass
  return max(32 * 1024 * 1024, min(cap * 3 // 4, 112 * 1024 * 1024))


def _pick_tile_m(m0, bytes_per_lane, resident_bytes, vmem_limit,
                 cap=8192, min_steps=4):
  """Largest 128-multiple lane tile whose double-buffered per-step footprint
  fits the VMEM budget, keeping >= min_steps grid steps so both v7x
  TensorCores pipeline."""
  m128 = _round_up(max(m0, 1), 128)
  budget = max(vmem_limit - 2 * resident_bytes, 1 << 20)
  max_tile = budget // (2 * max(bytes_per_lane, 1))
  tile = max(128, min(cap, m128, max_tile // 128 * 128))
  while tile > 128 and _cdiv(m128, tile) < min_steps:
    tile -= 128
  return tile


def _im2col_cnhw(x_cnhw, offsets, pad):
  """Taps of a (C, N, H, W) tensor for the given spatial offsets (stride 1,
  'same' output, zero padding).  Returns (len(offsets)*C, N*H*W); row
  g*C + c holds tap offsets[g] of channel c.  Source is already channel-major
  so this is pad + slice + stack + reshape only (no transpose)."""
  c, n, h, w = x_cnhw.shape
  xp = jnp.pad(x_cnhw, ((0, 0), (0, 0), (pad, pad), (pad, pad)))
  taps = [xp[:, :, pad + di: pad + di + h, pad + dj: pad + dj + w]
          for (di, dj) in offsets]
  t = jnp.stack(taps, axis=0)                       # (G, C, N, H, W)
  return t.reshape(len(offsets) * c, n * h * w)


def _bn_scale_bias(bn, arch_w=None):
  inv = bn["gamma"] * jax.lax.rsqrt(bn["var"] + BN_EPS)
  scale = inv
  bias = bn["beta"] - bn["mean"] * inv
  if arch_w is not None:
    scale = scale * arch_w
    bias = bias * arch_w
  return scale, bias


def _fold_dwpw(dw, pw, scale, offsets, dilation):
  """Fold depthwise (Cin,k,k) * pointwise (Cin,Cout) * per-Cout scale into one
  (Cout, len(offsets)*Cin) matrix over a shared tap set; tap groups the op
  does not touch get zero columns."""
  cin, k, _ = dw.shape
  cout = pw.shape[1]
  half = (k - 1) // 2
  zero = jnp.zeros((cin, cout), dw.dtype)
  cols = []
  for (di, dj) in offsets:
    blk = zero
    if di % dilation == 0 and dj % dilation == 0:
      i = di // dilation + half
      j = dj // dilation + half
      if 0 <= i < k and 0 <= j < k:
        blk = dw[:, i, j][:, None] * pw              # (Cin, Cout)
    cols.append(blk)
  wmat = jnp.stack(cols, axis=0) * scale[None, None, :]   # (G, Cin, Cout)
  return jnp.transpose(wmat, (2, 0, 1)).reshape(cout, len(offsets) * cin)


# ---------------------------------------------------------------------------
# Pallas kernels
# ---------------------------------------------------------------------------

def _make_stage_a_kernel(cin, h, w):
  """Stage A: ReLU -> {merged sep stage-1, merged dil convs} MXU contractions
  plus max/avg pool + skip from shared tap sets; writes the partial mixed
  output and the ReLU'd sep-conv intermediates."""
  pool = [((di, dj), (di + 2) * 5 + (dj + 2)) for (di, dj) in OFFS_3x3]

  def kernel(ta_ref, tb_ref, xf_ref, ohw_ref, ws1_ref, bs1_ref,
             wdil_ref, bdil_ref, pw_ref, mix_ref, h1_ref):
    ta = ta_ref[...]                                  # (25*Cin, T) bf16, raw x
    tb = tb_ref[...]                                  # (25*Cin, T) bf16, raw x
    ra = jnp.maximum(ta, 0.0)                         # ReLU feeds every conv
    rb = jnp.maximum(tb, 0.0)
    tile = ta.shape[1]

    # Both sep-conv first stages in one MXU contraction (BN1 folded into ws1);
    # the stage-2 leading ReLU is fused into the bf16 store.
    h1 = jnp.dot(ws1_ref[...], ra, preferred_element_type=jnp.float32)
    h1 = h1 + bs1_ref[...]
    h1_ref[...] = jnp.maximum(h1, 0.0).astype(h1_ref.dtype)

    # Both dilated convs in one MXU contraction (BN + arch weights folded).
    mix = jnp.dot(wdil_ref[...], rb, preferred_element_type=jnp.float32)
    mix = mix + bdil_ref[...]

    # max/avg pool + identity from the central 3x3 of tap-set A.  Tap validity
    # (count_include_pad=False / -inf max padding) comes from two precomputed
    # int32 coordinate rows -- no per-tap mask DMA, exact average divisor.
    oh = ohw_ref[0:1, :]                              # (1, T) int32
    ow = ohw_ref[1:2, :]
    neg = jnp.float32(-3.0e38)
    mx = jnp.full((cin, tile), neg, jnp.float32)
    ssum = jnp.zeros((cin, tile), jnp.float32)
    cnt = jnp.zeros((1, tile), jnp.float32)
    for (di, dj), g in pool:
      v = ta_ref[g * cin:(g + 1) * cin, :].astype(jnp.float32)
      valid = ((oh + di >= 0) & (oh + di < h) &
               (ow + dj >= 0) & (ow + dj < w))
      mx = jnp.maximum(mx, jnp.where(valid, v, neg))
      ssum = ssum + v                                  # padded taps are zero
      cnt = cnt + valid.astype(jnp.float32)
    avg = ssum / cnt                                   # exact divide, cnt >= 4
    skip = xf_ref[...]                                 # raw x, f32

    mix_ref[...] = mix + pw_ref[0] * mx + pw_ref[1] * avg + pw_ref[2] * skip

  return kernel


def _stage_b_kernel(tc_ref, ws2_ref, bs2_ref, acc_ref, o_ref):
  """Stage B: both sep-conv second stages in one MXU contraction (BN + arch
  weights folded), accumulated in place onto the stage-A mixed output."""
  y = jnp.dot(ws2_ref[...], tc_ref[...], preferred_element_type=jnp.float32)
  o_ref[...] = acc_ref[...] + y + bs2_ref[...]


# ---------------------------------------------------------------------------
# MixedOp forward
# ---------------------------------------------------------------------------

def mixed_op_forward(x_nchw, weights, params, stride=1):
  """MixedOp.forward: sum_i weights[i] * op_i(x).  NCHW in, NCHW out."""
  if stride != 1:
    # TODO(synk): FactorizedReduce / strided pooling (reduction cell) not
    # implemented; only the normal-cell (stride=1) MixedOp is covered.
    raise NotImplementedError("MixedOp with stride > 1 (reduction cell)")

  x = x_nchw.astype(jnp.float32)
  n, cin, h, w = x.shape
  cout = params["sep_conv_3x3"]["pw2"].shape[1]
  assert cout == cin, "pool / identity branches need C_in == C_out at stride 1"
  idx = {p: i for i, p in enumerate(DARTS_SPACE)}

  # ---- fold every conv op into (bf16 weight matrix, f32 bias) pairs --------
  a_s3, a_s5 = weights[idx["sep_conv_3x3"]], weights[idx["sep_conv_5x5"]]
  a_d3, a_d5 = weights[idx["dil_conv_3x3"]], weights[idx["dil_conv_5x5"]]
  p_s3, p_s5 = params["sep_conv_3x3"], params["sep_conv_5x5"]
  p_d3, p_d5 = params["dil_conv_3x3"], params["dil_conv_5x5"]

  s13, b13 = _bn_scale_bias(p_s3["bn1"])
  s15, b15 = _bn_scale_bias(p_s5["bn1"])
  s23, b23 = _bn_scale_bias(p_s3["bn2"], a_s3)
  s25, b25 = _bn_scale_bias(p_s5["bn2"], a_s5)
  sd3, bd3 = _bn_scale_bias(p_d3["bn"], a_d3)
  sd5, bd5 = _bn_scale_bias(p_d5["bn"], a_d5)

  ws1 = jnp.concatenate([
      _fold_dwpw(p_s3["dw1"], p_s3["pw1"], s13, OFFS_A, 1),
      _fold_dwpw(p_s5["dw1"], p_s5["pw1"], s15, OFFS_A, 1)], axis=0)
  bs1 = jnp.concatenate([b13, b15])[:, None].astype(jnp.float32)
  wdil = (_fold_dwpw(p_d3["dw"], p_d3["pw"], sd3, OFFS_B, 2) +
          _fold_dwpw(p_d5["dw"], p_d5["pw"], sd5, OFFS_B, 2))
  bdil = (bd3 + bd5)[:, None].astype(jnp.float32)
  ws2 = jnp.concatenate([
      _fold_dwpw(p_s3["dw2"], p_s3["pw2"], s23, OFFS_3x3, 1),
      _fold_dwpw(p_s5["dw2"], p_s5["pw2"], s25, OFFS_A, 1)], axis=1)
  bs2 = (b23 + b25)[:, None].astype(jnp.float32)
  ws1 = ws1.astype(TAP_DTYPE)
  wdil = wdil.astype(TAP_DTYPE)
  ws2 = ws2.astype(TAP_DTYPE)

  poolw = jnp.stack([weights[idx["max_pool_3x3"]],
                     weights[idx["avg_pool_3x3"]],
                     weights[idx["skip_connect"]]]).astype(jnp.float32)
  # 'none' contributes exactly zero and is skipped.

  # ---- layout: channel-major (C, M) with M = N*H*W on the lane axis --------
  x_cnhw = jnp.transpose(x, (1, 0, 2, 3))
  m0 = n * h * w
  ka, kc = 25 * cin, 34 * cin

  vmem_limit = _vmem_limit_bytes()
  bytes_per_lane = max(
      2 * ka * 2 + cin * 4 + 2 * 4 + cout * 4 + 2 * cin * 2,   # stage A streams
      kc * 2 + 2 * cout * 4)                                   # stage B streams
  resident = (ws1.size + wdil.size + ws2.size) * 2 + (2 * cin + 2 * cout) * 4
  # TODO(synk): for eval-net channel counts on v7x, split the K*K*Cin
  # contraction over an "arbitrary" grid axis instead of only shrinking tile_m.
  tile = _pick_tile_m(m0, bytes_per_lane, resident, vmem_limit)
  m_pad = _round_up(m0, tile)
  grid = (m_pad // tile,)
  cparams = pltpu.CompilerParams(dimension_semantics=("parallel",),
                                 vmem_limit_bytes=vmem_limit)

  def pad_m(t):
    return jnp.pad(t, ((0, 0), (0, m_pad - m0)))

  # TODO(synk): taps are still materialized by XLA in HBM (though shared across
  # ops); building them in-kernel from halo'd x blocks would cut traffic more.
  taps_a = pad_m(_im2col_cnhw(x_cnhw, OFFS_A, 2).astype(TAP_DTYPE))
  taps_b = pad_m(_im2col_cnhw(x_cnhw, OFFS_B, 4).astype(TAP_DTYPE))
  xf = pad_m(x_cnhw.reshape(cin, m0))
  pos = jnp.arange(m0, dtype=jnp.int32)
  ohw = pad_m(jnp.stack([(pos // w) % h, pos % w], axis=0))    # (2, M) int32

  row = lambda i: (0, i)        # tile over M (lane axis)
  res = lambda i: (0, 0)        # resident across the grid

  mix, h1r = pl.pallas_call(
      _make_stage_a_kernel(cin, h, w),
      grid=grid,
      in_specs=[
          pl.BlockSpec((ka, tile), row),                        # taps set A
          pl.BlockSpec((ka, tile), row),                        # taps set B
          pl.BlockSpec((cin, tile), row),                       # raw x (skip)
          pl.BlockSpec((2, tile), row),                         # (oh, ow) rows
          pl.BlockSpec((2 * cin, ka), res),                     # ws1 (resident)
          pl.BlockSpec((2 * cin, 1), res),                      # bs1
          pl.BlockSpec((cout, ka), res),                        # wdil
          pl.BlockSpec((cout, 1), res),                         # bdil
          pl.BlockSpec(memory_space=pltpu.MemorySpace.SMEM),    # pool weights
      ],
      out_specs=[pl.BlockSpec((cout, tile), row),
                 pl.BlockSpec((2 * cin, tile), row)],
      out_shape=[jax.ShapeDtypeStruct((cout, m_pad), jnp.float32),
                 jax.ShapeDtypeStruct((2 * cin, m_pad), TAP_DTYPE)],
      compiler_params=cparams,
  )(taps_a, taps_b, xf, ohw, ws1, bs1, wdil, bdil, poolw)

  # ---- stage B: both sep-conv second stages, accumulated onto `mix` --------
  h13 = h1r[:cin, :m0].reshape(cin, n, h, w)
  h15 = h1r[cin:, :m0].reshape(cin, n, h, w)
  taps_c = pad_m(jnp.concatenate([_im2col_cnhw(h13, OFFS_3x3, 1),
                                  _im2col_cnhw(h15, OFFS_A, 2)], axis=0))

  out = pl.pallas_call(
      _stage_b_kernel,
      grid=grid,
      in_specs=[
          pl.BlockSpec((kc, tile), row),
          pl.BlockSpec((cout, kc), res),
          pl.BlockSpec((cout, 1), res),
          pl.BlockSpec((cout, tile), row),                      # accumulator
      ],
      out_specs=pl.BlockSpec((cout, tile), row),
      out_shape=jax.ShapeDtypeStruct((cout, m_pad), jnp.float32),
      input_output_aliases={3: 0},                              # in-place acc
      compiler_params=cparams,
  )(taps_c, ws2, bs2, mix)

  out = out[:, :m0].reshape(cout, n, h, w)
  return jnp.transpose(out, (1, 0, 2, 3))


# ---------------------------------------------------------------------------
# Deterministic parameter initialization (shapes from __init__ of the ops)
# ---------------------------------------------------------------------------

def init_mixed_op_params(key, c_in, c_out):
  keys = iter(jax.random.split(key, 64))

  def nrm(shape, scale=0.3):
    return scale * jax.random.normal(next(keys), shape, dtype=jnp.float32)

  def bn(c):
    return dict(
        gamma=1.0 + 0.1 * jax.random.normal(next(keys), (c,), jnp.float32),
        beta=0.1 * jax.random.normal(next(keys), (c,), jnp.float32),
        mean=jnp.zeros((c,), jnp.float32),
        var=jnp.ones((c,), jnp.float32),
    )

  params = {}
  for name, k in (("sep_conv_3x3", 3), ("sep_conv_5x5", 5)):
    params[name] = dict(
        dw1=nrm((c_in, k, k)), pw1=nrm((c_in, c_in)), bn1=bn(c_in),
        dw2=nrm((c_in, k, k)), pw2=nrm((c_in, c_out)), bn2=bn(c_out))
  for name, k in (("dil_conv_3x3", 3), ("dil_conv_5x5", 5)):
    params[name] = dict(dw=nrm((c_in, k, k)), pw=nrm((c_in, c_out)), bn=bn(c_out))
  return params


if __name__ == "__main__":
  key = jax.random.PRNGKey(0)
  kx, kw, kp = jax.random.split(key, 3)

  N, C, H, W = 2, 4, 16, 16          # normal cell: C_in == C_out, stride == 1
  x = jax.random.normal(kx, (N, C, H, W), dtype=jnp.float32)
  alphas = jax.random.normal(kw, (len(DARTS_SPACE),), dtype=jnp.float32)
  weights = jax.nn.softmax(alphas)   # architecture weights, one per primitive
  params = init_mixed_op_params(kp, C, C)

  fwd = jax.jit(lambda x_, w_, p_: mixed_op_forward(x_, w_, p_, stride=1))
  out = fwd(x, weights, params)
  jax.block_until_ready(out)
  assert out.shape == (N, C, H, W) and out.dtype == jnp.float32
  print("KERNEL_OK")
</pallas_src>

<mosaic_0001>
module attributes {stable_mosaic.version = 11 : i64} {
  func.func @kernel(%arg0: i32, %arg1: memref<100x128xbf16, #tpu.memory_space<vmem>>, %arg2: memref<100x128xbf16, #tpu.memory_space<vmem>>, %arg3: memref<4x128xf32, #tpu.memory_space<vmem>>, %arg4: memref<2x128xi32, #tpu.memory_space<vmem>>, %arg5: memref<8x100xbf16, #tpu.memory_space<vmem>>, %arg6: memref<8x1xf32, #tpu.memory_space<vmem>>, %arg7: memref<4x100xbf16, #tpu.memory_space<vmem>>, %arg8: memref<4x1xf32, #tpu.memory_space<vmem>>, %arg9: memref<3xf32, #tpu.memory_space<smem>>, %arg10: memref<4x128xf32, #tpu.memory_space<vmem>>, %arg11: memref<8x128xbf16, #tpu.memory_space<vmem>>) attributes {dimension_semantics = [#tpu.dimension_semantics<parallel>], iteration_bounds = array<i64: 4>, scalar_prefetch = 0 : i64, scratch_operands = 0 : i64, tpu.core_type = #tpu.core_type<tc>, window_params = [{transform_indices = @transform_0, window_bounds = array<i64: 100, 128>}, {transform_indices = @transform_1, window_bounds = array<i64: 100, 128>}, {transform_indices = @transform_2, window_bounds = array<i64: 4, 128>}, {transform_indices = @transform_3, window_bounds = array<i64: 2, 128>}, {pipeline_mode = #tpu.pipeline_mode<synchronous>, transform_indices = @transform_4, window_bounds = array<i64: 8, 100>}, {pipeline_mode = #tpu.pipeline_mode<synchronous>, transform_indices = @transform_5, window_bounds = array<i64: 8, 1>}, {pipeline_mode = #tpu.pipeline_mode<synchronous>, transform_indices = @transform_6, window_bounds = array<i64: 4, 100>}, {pipeline_mode = #tpu.pipeline_mode<synchronous>, transform_indices = @transform_7, window_bounds = array<i64: 4, 1>}, {transform_indices = @transform_8, window_bounds = array<i64: 3>}, {transform_indices = @transform_9, window_bounds = array<i64: 4, 128>}, {transform_indices = @transform_10, window_bounds = array<i64: 8, 128>}]} {
    %c0 = arith.constant 0 : index
    %c0_0 = arith.constant 0 : index
    %0 = vector.load %arg1[%c0, %c0_0] : memref<100x128xbf16, #tpu.memory_space<vmem>>, vector<100x128xbf16>
    %c0_1 = arith.constant 0 : index
    %c0_2 = arith.constant 0 : index
    %1 = vector.load %arg2[%c0_1, %c0_2] : memref<100x128xbf16, #tpu.memory_space<vmem>>, vector<100x128xbf16>
    %cst = arith.constant 0.000000e+00 : bf16
    %2 = vector.broadcast %cst : bf16 to vector<100x128xbf16>
    %3 = arith.maximumf %0, %2 : vector<100x128xbf16>
    %cst_3 = arith.constant 0.000000e+00 : bf16
    %4 = vector.broadcast %cst_3 : bf16 to vector<100x128xbf16>
    %5 = arith.maximumf %1, %4 : vector<100x128xbf16>
    %c0_4 = arith.constant 0 : index
    %c0_5 = arith.constant 0 : index
    %6 = vector.load %arg5[%c0_4, %c0_5] : memref<8x100xbf16, #tpu.memory_space<vmem>>, vector<8x100xbf16>
    %cst_6 = arith.constant dense<0.000000e+00> : vector<8x128xf32>
    %7 = tpu.matmul %6, %3, %cst_6 {dimension_numbers = #tpu.dot_dimension_numbers<[1], [0], [0], [1], [0, 0, 1, 1], [], []>} : vector<8x100xbf16>, vector<100x128xbf16>, vector<8x128xf32> -> vector<8x128xf32>
    %c0_7 = arith.constant 0 : index
    %c0_8 = arith.constant 0 : index
    %8 = vector.load %arg6[%c0_7, %c0_8] : memref<8x1xf32, #tpu.memory_space<vmem>>, vector<8x1xf32>
    %9 = vector.broadcast %8 : vector<8x1xf32> to vector<8x128xf32>
    %10 = arith.addf %7, %9 : vector<8x128xf32>
    %cst_9 = arith.constant 0.000000e+00 : f32
    %11 = vector.broadcast %cst_9 : f32 to vector<8x128xf32>
    %12 = arith.maximumf %10, %11 : vector<8x128xf32>
    %13 = arith.truncf %12 : vector<8x128xf32> to vector<8x128xbf16>
    %c0_10 = arith.constant 0 : index
    %c0_11 = arith.constant 0 : index
    %14 = vector.load %arg11[%c0_10, %c0_11] : memref<8x128xbf16, #tpu.memory_space<vmem>>, vector<8x128xbf16>
    tpu.vector_store %arg11[%c0_10, %c0_11], %13 {strides = array<i32>} : memref<8x128xbf16, #tpu.memory_space<vmem>>, vector<8x128xbf16>,
    %c0_12 = arith.constant 0 : index
    %c0_13 = arith.constant 0 : index
    %15 = vector.load %arg7[%c0_12, %c0_13] : memref<4x100xbf16, #tpu.memory_space<vmem>>, vector<4x100xbf16>
    %cst_14 = arith.constant dense<0.000000e+00> : vector<4x128xf32>
    %16 = tpu.matmul %15, %5, %cst_14 {dimension_numbers = #tpu.dot_dimension_numbers<[1], [0], [0], [1], [0, 0, 1, 1], [], []>} : vector<4x100xbf16>, vector<100x128xbf16>, vector<4x128xf32> -> vector<4x128xf32>
    %c0_15 = arith.constant 0 : index
    %c0_16 = arith.constant 0 : index
    %17 = vector.load %arg8[%c0_15, %c0_16] : memref<4x1xf32, #tpu.memory_space<vmem>>, vector<4x1xf32>
    %18 = vector.broadcast %17 : vector<4x1xf32> to vector<4x128xf32>
    %19 = arith.addf %16, %18 : vector<4x128xf32>
    %c0_17 = arith.constant 0 : index
    %c0_18 = arith.constant 0 : index
    %20 = vector.load %arg4[%c0_17, %c0_18] : memref<2x128xi32, #tpu.memory_space<vmem>>, vector<1x128xi32>
    %c1 = arith.constant 1 : index
    %c0_19 = arith.constant 0 : index
    %21 = vector.load %arg4[%c1, %c0_19] : memref<2x128xi32, #tpu.memory_space<vmem>>, vector<1x128xi32>
    %cst_20 = arith.constant -3.000000e+38 : f32
    %22 = vector.broadcast %cst_20 : f32 to vector<4x128xf32>
    %cst_21 = arith.constant 0.000000e+00 : f32
    %23 = vector.broadcast %cst_21 : f32 to vector<4x128xf32>
    %cst_22 = arith.constant 0.000000e+00 : f32
    %24 = vector.broadcast %cst_22 : f32 to vector<1x128xf32>
    %c24 = arith.constant 24 : index
    %c0_23 = arith.constant 0 : index
    %25 = vector.load %arg1[%c24, %c0_23] : memref<100x128xbf16, #tpu.memory_space<vmem>>, vector<4x128xbf16>
    %26 = arith.extf %25 : vector<4x128xbf16> to vector<4x128xf32>
    %c-1_i32 = arith.constant -1 : i32
    %27 = vector.broadcast %c-1_i32 : i32 to vector<1x128xi32>
    %28 = arith.addi %20, %27 : vector<1x128xi32>
    %c0_i32 = arith.constant 0 : i32
    %29 = vector.broadcast %c0_i32 : i32 to vector<1x128xi32>
    %30 = arith.cmpi sge, %28, %29 : vector<1x128xi32>
    %c-1_i32_24 = arith.constant -1 : i32
    %31 = vector.broadcast %c-1_i32_24 : i32 to vector<1x128xi32>
    %32 = arith.addi %20, %31 : vector<1x128xi32>
    %c16_i32 = arith.constant 16 : i32
    %33 = vector.broadcast %c16_i32 : i32 to vector<1x128xi32>
    %34 = arith.cmpi slt, %32, %33 : vector<1x128xi32>
    %35 = arith.andi %30, %34 : vector<1x128xi1>
    %c-1_i32_25 = arith.constant -1 : i32
    %36 = vector.broadcast %c-1_i32_25 : i32 to vector<1x128xi32>
    %37 = arith.addi %21, %36 : vector<1x128xi32>
    %c0_i32_26 = arith.constant 0 : i32
    %38 = vector.broadcast %c0_i32_26 : i32 to vector<1x128xi32>
    %39 = arith.cmpi sge, %37, %38 : vector<1x128xi32>
    %40 = arith.andi %35, %39 : vector<1x128xi1>
    %c-1_i32_27 = arith.constant -1 : i32
    %41 = vector.broadcast %c-1_i32_27 : i32 to vector<1x128xi32>
    %42 = arith.addi %21, %41 : vector<1x128xi32>
    %c16_i32_28 = arith.constant 16 : i32
    %43 = vector.broadcast %c16_i32_28 : i32 to vector<1x128xi32>
    %44 = arith.cmpi slt, %42, %43 : vector<1x128xi32>
    %45 = arith.andi %40, %44 : vector<1x128xi1>
    %cst_29 = arith.constant -3.000000e+38 : f32
    %46 = vector.shape_cast %45 : vector<1x128xi1> to vector<1x128xi1>
    %47 = vector.broadcast %46 : vector<1x128xi1> to vector<4x128xi1>
    %48 = vector.broadcast %cst_29 : f32 to vector<4x128xf32>
    %49 = arith.select %47, %26, %48 : vector<4x128xi1>, vector<4x128xf32>
    %50 = arith.maximumf %22, %49 : vector<4x128xf32>
    %51 = arith.addf %23, %26 : vector<4x128xf32>
    %52 = arith.extui %45 : vector<1x128xi1> to vector<1x128xi32>
    %53 = arith.sitofp %52 : vector<1x128xi32> to vector<1x128xf32>
    %54 = arith.addf %24, %53 : vector<1x128xf32>
    %c28 = arith.constant 28 : index
    %c0_30 = arith.constant 0 : index
    %55 = vector.load %arg1[%c28, %c0_30] : memref<100x128xbf16, #tpu.memory_space<vmem>>, vector<4x128xbf16>
    %56 = arith.extf %55 : vector<4x128xbf16> to vector<4x128xf32>
    %c-1_i32_31 = arith.constant -1 : i32
    %57 = vector.broadcast %c-1_i32_31 : i32 to vector<1x128xi32>
    %58 = arith.addi %20, %57 : vector<1x128xi32>
    %c0_i32_32 = arith.constant 0 : i32
    %59 = vector.broadcast %c0_i32_32 : i32 to vector<1x128xi32>
    %60 = arith.cmpi sge, %58, %59 : vector<1x128xi32>
    %c-1_i32_33 = arith.constant -1 : i32
    %61 = vector.broadcast %c-1_i32_33 : i32 to vector<1x128xi32>
    %62 = arith.addi %20, %61 : vector<1x128xi32>
    %c16_i32_34 = arith.constant 16 : i32
    %63 = vector.broadcast %c16_i32_34 : i32 to vector<1x128xi32>
    %64 = arith.cmpi slt, %62, %63 : vector<1x128xi32>
    %65 = arith.andi %60, %64 : vector<1x128xi1>
    %c0_i32_35 = arith.constant 0 : i32
    %66 = vector.broadcast %c0_i32_35 : i32 to vector<1x128xi32>
    %67 = arith.addi %21, %66 : vector<1x128xi32>
    %c0_i32_36 = arith.constant 0 : i32
    %68 = vector.broadcast %c0_i32_36 : i32 to vector<1x128xi32>
    %69 = arith.cmpi sge, %67, %68 : vector<1x128xi32>
    %70 = arith.andi %65, %69 : vector<1x128xi1>
    %c0_i32_37 = arith.constant 0 : i32
    %71 = vector.broadcast %c0_i32_37 : i32 to vector<1x128xi32>
    %72 = arith.addi %21, %71 : vector<1x128xi32>
    %c16_i32_38 = arith.constant 16 : i32
    %73 = vector.broadcast %c16_i32_38 : i32 to vector<1x128xi32>
    %74 = arith.cmpi slt, %72, %73 : vector<1x128xi32>
    %75 = arith.andi %70, %74 : vector<1x128xi1>
    %cst_39 = arith.constant -3.000000e+38 : f32
    %76 = vector.shape_cast %75 : vector<1x128xi1> to vector<1x128xi1>
    %77 = vector.broadcast %76 : vector<1x128xi1> to vector<4x128xi1>
    %78 = vector.broadcast %cst_39 : f32 to vector<4x128xf32>
    %79 = arith.select %77, %56, %78 : vector<4x128xi1>, vector<4x128xf32>
    %80 = arith.maximumf %50, %79 : vector<4x128xf32>
    %81 = arith.addf %51, %56 : vector<4x128xf32>
    %82 = arith.extui %75 : vector<1x128xi1> to vector<1x128xi32>
    %83 = arith.sitofp %82 : vector<1x128xi32> to vector<1x128xf32>
    %84 = arith.addf %54, %83 : vector<1x128xf32>
    %c32 = arith.constant 32 : index
    %c0_40 = arith.constant 0 : index
    %85 = vector.load %arg1[%c32, %c0_40] : memref<100x128xbf16, #tpu.memory_space<vmem>>, vector<4x128xbf16>
    %86 = arith.extf %85 : vector<4x128xbf16> to vector<4x128xf32>
    %c-1_i32_41 = arith.constant -1 : i32
    %87 = vector.broadcast %c-1_i32_41 : i32 to vector<1x128xi32>
    %88 = arith.addi %20, %87 : vector<1x128xi32>
    %c0_i32_42 = arith.constant 0 : i32
    %89 = vector.broadcast %c0_i32_42 : i32 to vector<1x128xi32>
    %90 = arith.cmpi sge, %88, %89 : vector<1x128xi32>
    %c-1_i32_43 = arith.constant -1 : i32
    %91 = vector.broadcast %c-1_i32_43 : i32 to vector<1x128xi32>
    %92 = arith.addi %20, %91 : vector<1x128xi32>
    %c16_i32_44 = arith.constant 16 : i32
    %93 = vector.broadcast %c16_i32_44 : i32 to vector<1x128xi32>
    %94 = arith.cmpi slt, %92, %93 : vector<1x128xi32>
    %95 = arith.andi %90, %94 : vector<1x128xi1>
    %c1_i32 = arith.constant 1 : i32
    %96 = vector.broadcast %c1_i32 : i32 to vector<1x128xi32>
    %97 = arith.addi %21, %96 : vector<1x128xi32>
    %c0_i32_45 = arith.constant 0 : i32
    %98 = vector.broadcast %c0_i32_45 : i32 to vector<1x128xi32>
    %99 = arith.cmpi sge, %97, %98 : vector<1x128xi32>
    %100 = arith.andi %95, %99 : vector<1x128xi1>
    %c1_i32_46 = arith.constant 1 : i32
    %101 = vector.broadcast %c1_i32_46 : i32 to vector<1x128xi32>
    %102 = arith.addi %21, %101 : vector<1x128xi32>
    %c16_i32_47 = arith.constant 16 : i32
    %103 = vector.broadcast %c16_i32_47 : i32 to vector<1x128xi32>
    %104 = arith.cmpi slt, %102, %103 : vector<1x128xi32>
    %105 = arith.andi %100, %104 : vector<1x128xi1>
    %cst_48 = arith.constant -3.000000e+38 : f32
    %106 = vector.shape_cast %105 : vector<1x128xi1> to vector<1x128xi1>
    %107 = vector.broadcast %106 : vector<1x128xi1> to vector<4x128xi1>
    %108 = vector.broadcast %cst_48 : f32 to vector<4x128xf32>
    %109 = arith.select %107, %86, %108 : vector<4x128xi1>, vector<4x128xf32>
    %110 = arith.maximumf %80, %109 : vector<4x128xf32>
    %111 = arith.addf %81, %86 : vector<4x128xf32>
    %112 = arith.extui %105 : vector<1x128xi1> to vector<1x128xi32>
    %113 = arith.sitofp %112 : vector<1x128xi32> to vector<1x128xf32>
    %114 = arith.addf %84, %113 : vector<1x128xf32>
    %c44 = arith.constant 44 : index
    %c0_49 = arith.constant 0 : index
    %115 = vector.load %arg1[%c44, %c0_49] : memref<100x128xbf16, #tpu.memory_space<vmem>>, vector<4x128xbf16>
    %116 = arith.extf %115 : vector<4x128xbf16> to vector<4x128xf32>
    %c0_i32_50 = arith.constant 0 : i32
    %117 = vector.broadcast %c0_i32_50 : i32 to vector<1x128xi32>
    %118 = arith.addi %20, %117 : vector<1x128xi32>
    %c0_i32_51 = arith.constant 0 : i32
    %119 = vector.broadcast %c0_i32_51 : i32 to vector<1x128xi32>
    %120 = arith.cmpi sge, %118, %119 : vector<1x128xi32>
    %c0_i32_52 = arith.constant 0 : i32
    %121 = vector.broadcast %c0_i32_52 : i32 to vector<1x128xi32>
    %122 = arith.addi %20, %121 : vector<1x128xi32>
    %c16_i32_53 = arith.constant 16 : i32
    %123 = vector.broadcast %c16_i32_53 : i32 to vector<1x128xi32>
    %124 = arith.cmpi slt, %122, %123 : vector<1x128xi32>
    %125 = arith.andi %120, %124 : vector<1x128xi1>
    %c-1_i32_54 = arith.constant -1 : i32
    %126 = vector.broadcast %c-1_i32_54 : i32 to vector<1x128xi32>
    %127 = arith.addi %21, %126 : vector<1x128xi32>
    %c0_i32_55 = arith.constant 0 : i32
    %128 = vector.broadcast %c0_i32_55 : i32 to vector<1x128xi32>
    %129 = arith.cmpi sge, %127, %128 : vector<1x128xi32>
    %130 = arith.andi %125, %129 : vector<1x128xi1>
    %c-1_i32_56 = arith.constant -1 : i32
    %131 = vector.broadcast %c-1_i32_56 : i32 to vector<1x128xi32>
    %132 = arith.addi %21, %131 : vector<1x128xi32>
    %c16_i32_57 = arith.constant 16 : i32
    %133 = vector.broadcast %c16_i32_57 : i32 to vector<1x128xi32>
    %134 = arith.cmpi slt, %132, %133 : vector<1x128xi32>
    %135 = arith.andi %130, %134 : vector<1x128xi1>
    %cst_58 = arith.constant -3.000000e+38 : f32
    %136 = vector.shape_cast %135 : vector<1x128xi1> to vector<1x128xi1>
    %137 = vector.broadcast %136 : vector<1x128xi1> to vector<4x128xi1>
    %138 = vector.broadcast %cst_58 : f32 to vector<4x128xf32>
    %139 = arith.select %137, %116, %138 : vector<4x128xi1>, vector<4x128xf32>
    %140 = arith.maximumf %110, %139 : vector<4x128xf32>
    %141 = arith.addf %111, %116 : vector<4x128xf32>
    %142 = arith.extui %135 : vector<1x128xi1> to vector<1x128xi32>
    %143 = arith.sitofp %142 : vector<1x128xi32> to vector<1x128xf32>
    %144 = arith.addf %114, %143 : vector<1x128xf32>
    %c48 = arith.constant 48 : index
    %c0_59 = arith.constant 0 : index
    %145 = vector.load %arg1[%c48, %c0_59] : memref<100x128xbf16, #tpu.memory_space<vmem>>, vector<4x128xbf16>
    %146 = arith.extf %145 : vector<4x128xbf16> to vector<4x128xf32>
    %c0_i32_60 = arith.constant 0 : i32
    %147 = vector.broadcast %c0_i32_60 : i32 to vector<1x128xi32>
    %148 = arith.addi %20, %147 : vector<1x128xi32>
    %c0_i32_61 = arith.constant 0 : i32
    %149 = vector.broadcast %c0_i32_61 : i32 to vector<1x128xi32>
    %150 = arith.cmpi sge, %148, %149 : vector<1x128xi32>
    %c0_i32_62 = arith.constant 0 : i32
    %151 = vector.broadcast %c0_i32_62 : i32 to vector<1x128xi32>
    %152 = arith.addi %20, %151 : vector<1x128xi32>
    %c16_i32_63 = arith.constant 16 : i32
    %153 = vector.broadcast %c16_i32_63 : i32 to vector<1x128xi32>
    %154 = arith.cmpi slt, %152, %153 : vector<1x128xi32>
    %155 = arith.andi %150, %154 : vector<1x128xi1>
    %c0_i32_64 = arith.constant 0 : i32
    %156 = vector.broadcast %c0_i32_64 : i32 to vector<1x128xi32>
    %157 = arith.addi %21, %156 : vector<1x128xi32>
    %c0_i32_65 = arith.constant 0 : i32
    %158 = vector.broadcast %c0_i32_65 : i32 to vector<1x128xi32>
    %159 = arith.cmpi sge, %157, %158 : vector<1x128xi32>
    %160 = arith.andi %155, %159 : vector<1x128xi1>
    %c0_i32_66 = arith.constant 0 : i32
    %161 = vector.broadcast %c0_i32_66 : i32 to vector<1x128xi32>
    %162 = arith.addi %21, %161 : vector<1x128xi32>
    %c16_i32_67 = arith.constant 16 : i32
    %163 = vector.broadcast %c16_i32_67 : i32 to vector<1x128xi32>
    %164 = arith.cmpi slt, %162, %163 : vector<1x128xi32>
    %165 = arith.andi %160, %164 : vector<1x128xi1>
    %cst_68 = arith.constant -3.000000e+38 : f32
    %166 = vector.shape_cast %165 : vector<1x128xi1> to vector<1x128xi1>
    %167 = vector.broadcast %166 : vector<1x128xi1> to vector<4x128xi1>
    %168 = vector.broadcast %cst_68 : f32 to vector<4x128xf32>
    %169 = arith.select %167, %146, %168 : vector<4x128xi1>, vector<4x128xf32>
    %170 = arith.maximumf %140, %169 : vector<4x128xf32>
    %171 = arith.addf %141, %146 : vector<4x128xf32>
    %172 = arith.extui %165 : vector<1x128xi1> to vector<1x128xi32>
    %173 = arith.sitofp %172 : vector<1x128xi32> to vector<1x128xf32>
    %174 = arith.addf %144, %173 : vector<1x128xf32>
    %c52 = arith.constant 52 : index
    %c0_69 = arith.constant 0 : index
    %175 = vector.load %arg1[%c52, %c0_69] : memref<100x128xbf16, #tpu.memory_space<vmem>>, vector<4x128xbf16>
    %176 = arith.extf %175 : vector<4x128xbf16> to vector<4x128xf32>
    %c0_i32_70 = arith.constant 0 : i32
    %177 = vector.broadcast %c0_i32_70 : i32 to vector<1x128xi32>
    %178 = arith.addi %20, %177 : vector<1x128xi32>
    %c0_i32_71 = arith.constant 0 : i32
    %179 = vector.broadcast %c0_i32_71 : i32 to vector<1x128xi32>
    %180 = arith.cmpi sge, %178, %179 : vector<1x128xi32>
    %c0_i32_72 = arith.constant 0 : i32
    %181 = vector.broadcast %c0_i32_72 : i32 to vector<1x128xi32>
    %182 = arith.addi %20, %181 : vector<1x128xi32>
    %c16_i32_73 = arith.constant 16 : i32
    %183 = vector.broadcast %c16_i32_73 : i32 to vector<1x128xi32>
    %184 = arith.cmpi slt, %182, %183 : vector<1x128xi32>
    %185 = arith.andi %180, %184 : vector<1x128xi1>
    %c1_i32_74 = arith.constant 1 : i32
    %186 = vector.broadcast %c1_i32_74 : i32 to vector<1x128xi32>
    %187 = arith.addi %21, %186 : vector<1x128xi32>
    %c0_i32_75 = arith.constant 0 : i32
    %188 = vector.broadcast %c0_i32_75 : i32 to vector<1x128xi32>
    %189 = arith.cmpi sge, %187, %188 : vector<1x128xi32>
    %190 = arith.andi %185, %189 : vector<1x128xi1>
    %c1_i32_76 = arith.constant 1 : i32
    %191 = vector.broadcast %c1_i32_76 : i32 to vector<1x128xi32>
    %192 = arith.addi %21, %191 : vector<1x128xi32>
    %c16_i32_77 = arith.constant 16 : i32
    %193 = vector.broadcast %c16_i32_77 : i32 to vector<1x128xi32>
    %194 = arith.cmpi slt, %192, %193 : vector<1x128xi32>
    %195 = arith.andi %190, %194 : vector<1x128xi1>
    %cst_78 = arith.constant -3.000000e+38 : f32
    %196 = vector.shape_cast %195 : vector<1x128xi1> to vector<1x128xi1>
    %197 = vector.broadcast %196 : vector<1x128xi1> to vector<4x128xi1>
    %198 = vector.broadcast %cst_78 : f32 to vector<4x128xf32>
    %199 = arith.select %197, %176, %198 : vector<4x128xi1>, vector<4x128xf32>
    %200 = arith.maximumf %170, %199 : vector<4x128xf32>
    %201 = arith.addf %171, %176 : vector<4x128xf32>
    %202 = arith.extui %195 : vector<1x128xi1> to vector<1x128xi32>
    %203 = arith.sitofp %202 : vector<1x128xi32> to vector<1x128xf32>
    %204 = arith.addf %174, %203 : vector<1x128xf32>
    %c64 = arith.constant 64 : index
    %c0_79 = arith.constant 0 : index
    %205 = vector.load %arg1[%c64, %c0_79] : memref<100x128xbf16, #tpu.memory_space<vmem>>, vector<4x128xbf16>
    %206 = arith.extf %205 : vector<4x128xbf16> to vector<4x128xf32>
    %c1_i32_80 = arith.constant 1 : i32
    %207 = vector.broadcast %c1_i32_80 : i32 to vector<1x128xi32>
    %208 = arith.addi %20, %207 : vector<1x128xi32>
    %c0_i32_81 = arith.constant 0 : i32
    %209 = vector.broadcast %c0_i32_81 : i32 to vector<1x128xi32>
    %210 = arith.cmpi sge, %208, %209 : vector<1x128xi32>
    %c1_i32_82 = arith.constant 1 : i32
    %211 = vector.broadcast %c1_i32_82 : i32 to vector<1x128xi32>
    %212 = arith.addi %20, %211 : vector<1x128xi32>
    %c16_i32_83 = arith.constant 16 : i32
    %213 = vector.broadcast %c16_i32_83 : i32 to vector<1x128xi32>
    %214 = arith.cmpi slt, %212, %213 : vector<1x128xi32>
    %215 = arith.andi %210, %214 : vector<1x128xi1>
    %c-1_i32_84 = arith.constant -1 : i32
    %216 = vector.broadcast %c-1_i32_84 : i32 to vector<1x128xi32>
    %217 = arith.addi %21, %216 : vector<1x128xi32>
    %c0_i32_85 = arith.constant 0 : i32
    %218 = vector.broadcast %c0_i32_85 : i32 to vector<1x128xi32>
    %219 = arith.cmpi sge, %217, %218 : vector<1x128xi32>
    %220 = arith.andi %215, %219 : vector<1x128xi1>
    %c-1_i32_86 = arith.constant -1 : i32
    %221 = vector.broadcast %c-1_i32_86 : i32 to vector<1x128xi32>
    %222 = arith.addi %21, %221 : vector<1x128xi32>
    %c16_i32_87 = arith.constant 16 : i32
    %223 = vector.broadcast %c16_i32_87 : i32 to vector<1x128xi32>
    %224 = arith.cmpi slt, %222, %223 : vector<1x128xi32>
    %225 = arith.andi %220, %224 : vector<1x128xi1>
    %cst_88 = arith.constant -3.000000e+38 : f32
    %226 = vector.shape_cast %225 : vector<1x128xi1> to vector<1x128xi1>
    %227 = vector.broadcast %226 : vector<1x128xi1> to vector<4x128xi1>
    %228 = vector.broadcast %cst_88 : f32 to vector<4x128xf32>
    %229 = arith.select %227, %206, %228 : vector<4x128xi1>, vector<4x128xf32>
    %230 = arith.maximumf %200, %229 : vector<4x128xf32>
    %231 = arith.addf %201, %206 : vector<4x128xf32>
    %232 = arith.extui %225 : vector<1x128xi1> to vector<1x128xi32>
    %233 = arith.sitofp %232 : vector<1x128xi32> to vector<1x128xf32>
    %234 = arith.addf %204, %233 : vector<1x128xf32>
    %c68 = arith.constant 68 : index
    %c0_89 = arith.constant 0 : index
    %235 = vector.load %arg1[%c68, %c0_89] : memref<100x128xbf16, #tpu.memory_space<vmem>>, vector<4x128xbf16>
    %236 = arith.extf %235 : vector<4x128xbf16> to vector<4x128xf32>
    %c1_i32_90 = arith.constant 1 : i32
    %237 = vector.broadcast %c1_i32_90 : i32 to vector<1x128xi32>
    %238 = arith.addi %20, %237 : vector<1x128xi32>
    %c0_i32_91 = arith.constant 0 : i32
    %239 = vector.broadcast %c0_i32_91 : i32 to vector<1x128xi32>
    %240 = arith.cmpi sge, %238, %239 : vector<1x128xi32>
    %c1_i32_92 = arith.constant 1 : i32
    %241 = vector.broadcast %c1_i32_92 : i32 to vector<1x128xi32>
    %242 = arith.addi %20, %241 : vector<1x128xi32>
    %c16_i32_93 = arith.constant 16 : i32
    %243 = vector.broadcast %c16_i32_93 : i32 to vector<1x128xi32>
    %244 = arith.cmpi slt, %242, %243 : vector<1x128xi32>
    %245 = arith.andi %240, %244 : vector<1x128xi1>
    %c0_i32_94 = arith.constant 0 : i32
    %246 = vector.broadcast %c0_i32_94 : i32 to vector<1x128xi32>
    %247 = arith.addi %21, %246 : vector<1x128xi32>
    %c0_i32_95 = arith.constant 0 : i32
    %248 = vector.broadcast %c0_i32_95 : i32 to vector<1x128xi32>
    %249 = arith.cmpi sge, %247, %248 : vector<1x128xi32>
    %250 = arith.andi %245, %249 : vector<1x128xi1>
    %c0_i32_96 = arith.constant 0 : i32
    %251 = vector.broadcast %c0_i32_96 : i32 to vector<1x128xi32>
    %252 = arith.addi %21, %251 : vector<1x128xi32>
    %c16_i32_97 = arith.constant 16 : i32
    %253 = vector.broadcast %c16_i32_97 : i32 to vector<1x128xi32>
    %254 = arith.cmpi slt, %252, %253 : vector<1x128xi32>
    %255 = arith.andi %250, %254 : vector<1x128xi1>
    %cst_98 = arith.constant -3.000000e+38 : f32
    %256 = vector.shape_cast %255 : vector<1x128xi1> to vector<1x128xi1>
    %257 = vector.broadcast %256 : vector<1x128xi1> to vector<4x128xi1>
    %258 = vector.broadcast %cst_98 : f32 to vector<4x128xf32>
    %259 = arith.select %257, %236, %258 : vector<4x128xi1>, vector<4x128xf32>
    %260 = arith.maximumf %230, %259 : vector<4x128xf32>
    %261 = arith.addf %231, %236 : vector<4x128xf32>
    %262 = arith.extui %255 : vector<1x128xi1> to vector<1x128xi32>
    %263 = arith.sitofp %262 : vector<1x128xi32> to vector<1x128xf32>
    %264 = arith.addf %234, %263 : vector<1x128xf32>
    %c72 = arith.constant 72 : index
    %c0_99 = arith.constant 0 : index
    %265 = vector.load %arg1[%c72, %c0_99] : memref<100x128xbf16, #tpu.memory_space<vmem>>, vector<4x128xbf16>
    %266 = arith.extf %265 : vector<4x128xbf16> to vector<4x128xf32>
    %c1_i32_100 = arith.constant 1 : i32
    %267 = vector.broadcast %c1_i32_100 : i32 to vector<1x128xi32>
    %268 = arith.addi %20, %267 : vector<1x128xi32>
    %c0_i32_101 = arith.constant 0 : i32
    %269 = vector.broadcast %c0_i32_101 : i32 to vector<1x128xi32>
    %270 = arith.cmpi sge, %268, %269 : vector<1x128xi32>
    %c1_i32_102 = arith.constant 1 : i32
    %271 = vector.broadcast %c1_i32_102 : i32 to vector<1x128xi32>
    %272 = arith.addi %20, %271 : vector<1x128xi32>
    %c16_i32_103 = arith.constant 16 : i32
    %273 = vector.broadcast %c16_i32_103 : i32 to vector<1x128xi32>
    %274 = arith.cmpi slt, %272, %273 : vector<1x128xi32>
    %275 = arith.andi %270, %274 : vector<1x128xi1>
    %c1_i32_104 = arith.constant 1 : i32
    %276 = vector.broadcast %c1_i32_104 : i32 to vector<1x128xi32>
    %277 = arith.addi %21, %276 : vector<1x128xi32>
    %c0_i32_105 = arith.constant 0 : i32
    %278 = vector.broadcast %c0_i32_105 : i32 to vector<1x128xi32>
    %279 = arith.cmpi sge, %277, %278 : vector<1x128xi32>
    %280 = arith.andi %275, %279 : vector<1x128xi1>
    %c1_i32_106 = arith.constant 1 : i32
    %281 = vector.broadcast %c1_i32_106 : i32 to vector<1x128xi32>
    %282 = arith.addi %21, %281 : vector<1x128xi32>
    %c16_i32_107 = arith.constant 16 : i32
    %283 = vector.broadcast %c16_i32_107 : i32 to vector<1x128xi32>
    %284 = arith.cmpi slt, %282, %283 : vector<1x128xi32>
    %285 = arith.andi %280, %284 : vector<1x128xi1>
    %cst_108 = arith.constant -3.000000e+38 : f32
    %286 = vector.shape_cast %285 : vector<1x128xi1> to vector<1x128xi1>
    %287 = vector.broadcast %286 : vector<1x128xi1> to vector<4x128xi1>
    %288 = vector.broadcast %cst_108 : f32 to vector<4x128xf32>
    %289 = arith.select %287, %266, %288 : vector<4x128xi1>, vector<4x128xf32>
    %290 = arith.maximumf %260, %289 : vector<4x128xf32>
    %291 = arith.addf %261, %266 : vector<4x128xf32>
    %292 = arith.extui %285 : vector<1x128xi1> to vector<1x128xi32>
    %293 = arith.sitofp %292 : vector<1x128xi32> to vector<1x128xf32>
    %294 = arith.addf %264, %293 : vector<1x128xf32>
    %295 = vector.broadcast %294 : vector<1x128xf32> to vector<4x128xf32>
    %296 = arith.divf %291, %295 : vector<4x128xf32>
    %c0_109 = arith.constant 0 : index
    %c0_110 = arith.constant 0 : index
    %297 = vector.load %arg3[%c0_109, %c0_110] : memref<4x128xf32, #tpu.memory_space<vmem>>, vector<4x128xf32>
    %c0_111 = arith.constant 0 : index
    %298 = memref.load %arg9[%c0_111] : memref<3xf32, #tpu.memory_space<smem>>
    %299 = vector.broadcast %298 : f32 to vector<4x128xf32>
    %300 = arith.mulf %299, %290 : vector<4x128xf32>
    %301 = arith.addf %19, %300 : vector<4x128xf32>
    %c1_112 = arith.constant 1 : index
    %302 = memref.load %arg9[%c1_112] : memref<3xf32, #tpu.memory_space<smem>>
    %303 = vector.broadcast %302 : f32 to vector<4x128xf32>
    %304 = arith.mulf %303, %296 : vector<4x128xf32>
    %305 = arith.addf %301, %304 : vector<4x128xf32>
    %c2 = arith.constant 2 : index
    %306 = memref.load %arg9[%c2] : memref<3xf32, #tpu.memory_space<smem>>
    %307 = vector.broadcast %306 : f32 to vector<4x128xf32>
    %308 = arith.mulf %307, %297 : vector<4x128xf32>
    %309 = arith.addf %305, %308 : vector<4x128xf32>
    %c0_113 = arith.constant 0 : index
    %c0_114 = arith.constant 0 : index
    %310 = vector.load %arg10[%c0_113, %c0_114] : memref<4x128xf32, #tpu.memory_space<vmem>>, vector<4x128xf32>
    tpu.vector_store %arg10[%c0_113, %c0_114], %309 {strides = array<i32>} : memref<4x128xf32, #tpu.memory_space<vmem>>, vector<4x128xf32>,
    return
  }
  func.func @transform_0(%arg0: i32) -> (i32, i32) {
    %c0_i32 = arith.constant 0 : i32
    %c0_i32_0 = arith.constant 0 : i32
    return %c0_i32, %arg0 : i32, i32
  }
  func.func @transform_1(%arg0: i32) -> (i32, i32) {
    %c0_i32 = arith.constant 0 : i32
    %c0_i32_0 = arith.constant 0 : i32
    return %c0_i32, %arg0 : i32, i32
  }
  func.func @transform_2(%arg0: i32) -> (i32, i32) {
    %c0_i32 = arith.constant 0 : i32
    %c0_i32_0 = arith.constant 0 : i32
    return %c0_i32, %arg0 : i32, i32
  }
  func.func @transform_3(%arg0: i32) -> (i32, i32) {
    %c0_i32 = arith.constant 0 : i32
    %c0_i32_0 = arith.constant 0 : i32
    return %c0_i32, %arg0 : i32, i32
  }
  func.func @transform_4(%arg0: i32) -> (i32, i32) {
    %c0_i32 = arith.constant 0 : i32
    %c0_i32_0 = arith.constant 0 : i32
    %c0_i32_1 = arith.constant 0 : i32
    return %c0_i32, %c0_i32_0 : i32, i32
  }
  func.func @transform_5(%arg0: i32) -> (i32, i32) {
    %c0_i32 = arith.constant 0 : i32
    %c0_i32_0 = arith.constant 0 : i32
    %c0_i32_1 = arith.constant 0 : i32
    return %c0_i32, %c0_i32_0 : i32, i32
  }
  func.func @transform_6(%arg0: i32) -> (i32, i32) {
    %c0_i32 = arith.constant 0 : i32
    %c0_i32_0 = arith.constant 0 : i32
    %c0_i32_1 = arith.constant 0 : i32
    return %c0_i32, %c0_i32_0 : i32, i32
  }
  func.func @transform_7(%arg0: i32) -> (i32, i32) {
    %c0_i32 = arith.constant 0 : i32
    %c0_i32_0 = arith.constant 0 : i32
    %c0_i32_1 = arith.constant 0 : i32
    return %c0_i32, %c0_i32_0 : i32, i32
  }
  func.func @transform_8(%arg0: i32) -> i32 {
    %c0_i32 = arith.constant 0 : i32
    %c0_i32_0 = arith.constant 0 : i32
    return %c0_i32 : i32
  }
  func.func @transform_9(%arg0: i32) -> (i32, i32) {
    %c0_i32 = arith.constant 0 : i32
    %c0_i32_0 = arith.constant 0 : i32
    return %c0_i32, %arg0 : i32, i32
  }
  func.func @transform_10(%arg0: i32) -> (i32, i32) {
    %c0_i32 = arith.constant 0 : i32
    %c0_i32_0 = arith.constant 0 : i32
    return %c0_i32, %arg0 : i32, i32
  }
}

module attributes {stable_mosaic.version = 11 : i64} {
  func.func @_stage_b_kernel(%arg0: i32, %arg1: memref<136x128xbf16, #tpu.memory_space<vmem>>, %arg2: memref<4x136xbf16, #tpu.memory_space<vmem>>, %arg3: memref<4x1xf32, #tpu.memory_space<vmem>>, %arg4: memref<4x128xf32, #tpu.memory_space<vmem>>, %arg5: memref<4x128xf32, #tpu.memory_space<vmem>>) attributes {dimension_semantics = [#tpu.dimension_semantics<parallel>], iteration_bounds = array<i64: 4>, scalar_prefetch = 0 : i64, scratch_operands = 0 : i64, tpu.core_type = #tpu.core_type<tc>, window_params = [{transform_indices = @transform_0, window_bounds = array<i64: 136, 128>}, {pipeline_mode = #tpu.pipeline_mode<synchronous>, transform_indices = @transform_1, window_bounds = array<i64: 4, 136>}, {pipeline_mode = #tpu.pipeline_mode<synchronous>, transform_indices = @transform_2, window_bounds = array<i64: 4, 1>}, {transform_indices = @transform_3, window_bounds = array<i64: 4, 128>}, {transform_indices = @transform_4, window_bounds = array<i64: 4, 128>}]} {
    %c0 = arith.constant 0 : index
    %c0_0 = arith.constant 0 : index
    %0 = vector.load %arg2[%c0, %c0_0] : memref<4x136xbf16, #tpu.memory_space<vmem>>, vector<4x136xbf16>
    %c0_1 = arith.constant 0 : index
    %c0_2 = arith.constant 0 : index
    %1 = vector.load %arg1[%c0_1, %c0_2] : memref<136x128xbf16, #tpu.memory_space<vmem>>, vector<136x128xbf16>
    %cst = arith.constant dense<0.000000e+00> : vector<4x128xf32>
    %2 = tpu.matmul %0, %1, %cst {dimension_numbers = #tpu.dot_dimension_numbers<[1], [0], [0], [1], [0, 0, 1, 1], [], []>} : vector<4x136xbf16>, vector<136x128xbf16>, vector<4x128xf32> -> vector<4x128xf32>
    %c0_3 = arith.constant 0 : index
    %c0_4 = arith.constant 0 : index
    %3 = vector.load %arg4[%c0_3, %c0_4] : memref<4x128xf32, #tpu.memory_space<vmem>>, vector<4x128xf32>
    %4 = arith.addf %3, %2 : vector<4x128xf32>
    %c0_5 = arith.constant 0 : index
    %c0_6 = arith.constant 0 : index
    %5 = vector.load %arg3[%c0_5, %c0_6] : memref<4x1xf32, #tpu.memory_space<vmem>>, vector<4x1xf32>
    %6 = vector.broadcast %5 : vector<4x1xf32> to vector<4x128xf32>
    %7 = arith.addf %4, %6 : vector<4x128xf32>
    %c0_7 = arith.constant 0 : index
    %c0_8 = arith.constant 0 : index
    %8 = vector.load %arg5[%c0_7, %c0_8] : memref<4x128xf32, #tpu.memory_space<vmem>>, vector<4x128xf32>
    tpu.vector_store %arg5[%c0_7, %c0_8], %7 {strides = array<i32>} : memref<4x128xf32, #tpu.memory_space<vmem>>, vector<4x128xf32>,
    return
  }
  func.func @transform_0(%arg0: i32) -> (i32, i32) {
    %c0_i32 = arith.constant 0 : i32
    %c0_i32_0 = arith.constant 0 : i32
    return %c0_i32, %arg0 : i32, i32
  }
  func.func @transform_1(%arg0: i32) -> (i32, i32) {
    %c0_i32 = arith.constant 0 : i32
    %c0_i32_0 = arith.constant 0 : i32
    %c0_i32_1 = arith.constant 0 : i32
    return %c0_i32, %c0_i32_0 : i32, i32
  }
  func.func @transform_2(%arg0: i32) -> (i32, i32) {
    %c0_i32 = arith.constant 0 : i32
    %c0_i32_0 = arith.constant 0 : i32
    %c0_i32_1 = arith.constant 0 : i32
    return %c0_i32, %c0_i32_0 : i32, i32
  }
  func.func @transform_3(%arg0: i32) -> (i32, i32) {
    %c0_i32 = arith.constant 0 : i32
    %c0_i32_0 = arith.constant 0 : i32
    return %c0_i32, %arg0 : i32, i32
  }
  func.func @transform_4(%arg0: i32) -> (i32, i32) {
    %c0_i32 = arith.constant 0 : i32
    %c0_i32_0 = arith.constant 0 : i32
    return %c0_i32, %arg0 : i32, i32
  }
}

</mosaic_0001>

<llo_original>
// kernel: _lambda_.2
$region0: #{_lambda_.2}
  #allocation0 [shape = 'u32[]', space=smem, size = 0x4, offset = 0x4, fixed_abs, tag = 'smem constant byte address 0x4 - core index']
  #allocation1 [shape = 'u32[144,128]{1,0:T(1,128)}', space=vmem, size = 0x12000, scoped, tag = 'internal scratch']
  %s0 = inlined_call_operand.vmem [shape: bf16[100,512], index: 0, kind: input, shape index: {}]
  %s1 = inlined_call_operand.vmem [shape: bf16[100,512], index: 1, kind: input, shape index: {}]
  %s2 = inlined_call_operand.vmem [shape: f32[4,512], index: 2, kind: input, shape index: {}]
  %s3 = inlined_call_operand.vmem [shape: s32[2,512], index: 3, kind: input, shape index: {}]
  %s4 = inlined_call_operand.vmem [shape: bf16[8,100], index: 4, kind: input, shape index: {}]
  %s5 = inlined_call_operand.vmem [shape: f32[8,1], index: 5, kind: input, shape index: {}]
  %s6 = inlined_call_operand.vmem [shape: bf16[4,100], index: 6, kind: input, shape index: {}]
  %s7 = inlined_call_operand.vmem [shape: f32[4,1], index: 7, kind: input, shape index: {}]
  %s8 = inlined_call_operand.vmem [shape: f32[3], index: 8, kind: input, shape index: {}]
  %s9 = inlined_call_operand.vmem [shape: f32[4,512], index: 9, kind: output, shape index: {0}]
  %s10 = inlined_call_operand.vmem [shape: bf16[8,512], index: 10, kind: output, shape index: {1}]
  %11 = xla_tuple %s9, %s10
  %s12 = sld [smem:[#allocation0]]
  $region163: #{_lambda_.2} parent=0
    _
  %s14 = ssub.s32 1, %s12
  %s15 = scalar_select 0, %s14, %s12
  $region1: #{_lambda_.2} parent=0
    #allocation2 [shape = 'u8[53248]{0}', space=vmem, size = 0xd000, scoped, tag = 'input window, operand 0']
    #allocation3 [shape = 'u8[53248]{0}', space=vmem, size = 0xd000, scoped, tag = 'input window, operand 1']
    #allocation4 [shape = 'u8[512]{0}', space=smem, size = 0x200, scoped, tag = 'input window, operand 8, single buffered']
    #allocation5 [shape = 's32[2]{0}', space=sflag, size = 0x8, scoped, tag = 'scoped memory for _lambda_.2']
    %16 = vsyncpa [#allocation5], 0
    loop: start=0, step=1, limit=6
    $region2: #{_lambda_.2} parent=1 // loop_pre_header
      _
    $region3: #{_lambda_.2} parent=1 // loop_header
      %s18 = sphi 0, %s22
      %p19 = scmp.ge.s32.totalorder %s18, 6
      %s28 = sphi 0, %s30
      %s31 = sphi 0, %s28
      %s32 = sphi 0, %s31
      %s48 = sphi 0, %s32
      %s54 = sphi 0, %s56
      %s57 = sphi 0, %s54
      %s58 = sphi 0, %s57
      %s74 = sphi 0, %s58
      %s80 = sphi 0, %s82
      %s83 = sphi 0, %s80
      %s84 = sphi 0, %s83
      %s100 = sphi 0, %s84
      %s106 = sphi 0, %s108
      %s109 = sphi 0, %s106
      %s110 = sphi 0, %s109
      %s126 = sphi 0, %s110
      %s130 = sphi 0, %s130
      %s132 = sphi 0, %s130
      %s133 = sphi 0, %s132
      %s147 = sphi 0, %s133
      %s151 = sphi 0, %s151
      %s153 = sphi 0, %s151
      %s154 = sphi 0, %s153
      %s168 = sphi 0, %s154
      %s172 = sphi 0, %s172
      %s174 = sphi 0, %s172
      %s175 = sphi 0, %s174
      %s189 = sphi 0, %s175
      %s193 = sphi 0, %s193
      %s195 = sphi 0, %s193
      %s196 = sphi 0, %s195
      %s210 = sphi 0, %s196
      %s214 = sphi 0, %s214
      %s216 = sphi 0, %s214
      %s217 = sphi 0, %s216
      %s231 = sphi 0, %s217
      %s237 = sphi 0, %s239
      %s240 = sphi 0, %s237
      %s241 = sphi 0, %s240
      %s257 = sphi 0, %s241
      %s263 = sphi 0, %s265
      %s266 = sphi 0, %s263
      %s267 = sphi 0, %s266
      %s283 = sphi 0, %s267
    $region4: #{_lambda_.2} parent=1 // loop_header_branch
      %21 = sbr.rel (%p19) target = $region8
    $region5: #{_lambda_.2} parent=1 // loop_body
      %s23 = ssub.s32 %s18, 1
      %s24 = ssub.s32 %s18, 2
      %s25 = sadd.s32 %s18, 1
      %s26 = ssub.s32 %s18, %s25
      %p27 = scmp.eq.s32.totalorder %s26, 0
      %s29 = sadd.s32 %s28, 1
      %s30 = scalar_select %p27, %s28, %s29
      %p33 = pneg %p27
      %p34 = scmp.eq.s32.totalorder %s18, 3
      %p35 = por %p33, %p34
      %p36 = scmp.ne.s32.totalorder %s28, %s31
      %p37 = scmp.eq.s32.totalorder %s18, 0
      %p38 = por %p36, %p37
      %p39 = scmp.ne.s32.totalorder %s28, %s31
      %p40 = scmp.eq.s32.totalorder %s23, 3
      %p41 = por %p39, %p40
      %p42 = scmp.ne.s32.totalorder %s31, %s32
      %p43 = scmp.eq.s32.totalorder %s23, 0
      %p44 = por %p42, %p43
      %p45 = scmp.ne.s32.totalorder %s31, %s32
      %p46 = scmp.eq.s32.totalorder %s24, 3
      %p47 = por %p45, %p46
      %p49 = scmp.ne.s32.totalorder %s32, %s48
      %p50 = scmp.eq.s32.totalorder %s24, 0
      %p51 = por %p49, %p50
      %s52 = ssub.s32 %s18, %s25
      %p53 = scmp.eq.s32.totalorder %s52, 0
      %s55 = sadd.s32 %s54, 1
      %s56 = scalar_select %p53, %s54, %s55
      %p59 = pneg %p53
      %p60 = scmp.eq.s32.totalorder %s18, 3
      %p61 = por %p59, %p60
      %p62 = scmp.ne.s32.totalorder %s54, %s57
      %p63 = scmp.eq.s32.totalorder %s18, 0
      %p64 = por %p62, %p63
      %p65 = scmp.ne.s32.totalorder %s54, %s57
      %p66 = scmp.eq.s32.totalorder %s23, 3
      %p67 = por %p65, %p66
      %p68 = scmp.ne.s32.totalorder %s57, %s58
      %p69 = scmp.eq.s32.totalorder %s23, 0
      %p70 = por %p68, %p69
      %p71 = scmp.ne.s32.totalorder %s57, %s58
      %p72 = scmp.eq.s32.totalorder %s24, 3
      %p73 = por %p71, %p72
      %p75 = scmp.ne.s32.totalorder %s58, %s74
      %p76 = scmp.eq.s32.totalorder %s24, 0
      %p77 = por %p75, %p76
      %s78 = ssub.s32 %s18, %s25
      %p79 = scmp.eq.s32.totalorder %s78, 0
      %s81 = sadd.s32 %s80, 1
      %s82 = scalar_select %p79, %s80, %s81
      %p85 = pneg %p79
      %p86 = scmp.eq.s32.totalorder %s18, 3
      %p87 = por %p85, %p86
      %p88 = scmp.ne.s32.totalorder %s80, %s83
      %p89 = scmp.eq.s32.totalorder %s18, 0
      %p90 = por %p88, %p89
      %p91 = scmp.ne.s32.totalorder %s80, %s83
      %p92 = scmp.eq.s32.totalorder %s23, 3
      %p93 = por %p91, %p92
      %p94 = scmp.ne.s32.totalorder %s83, %s84
      %p95 = scmp.eq.s32.totalorder %s23, 0
      %p96 = por %p94, %p95
      %p97 = scmp.ne.s32.totalorder %s83, %s84
      %p98 = scmp.eq.s32.totalorder %s24, 3
      %p99 = por %p97, %p98
      %p101 = scmp.ne.s32.totalorder %s84, %s100
      %p102 = scmp.eq.s32.totalorder %s24, 0
      %p103 = por %p101, %p102
      %s104 = ssub.s32 %s18, %s25
      %p105 = scmp.eq.s32.totalorder %s104, 0
      %s107 = sadd.s32 %s106, 1
      %s108 = scalar_select %p105, %s106, %s107
      %p111 = pneg %p105
      %p112 = scmp.eq.s32.totalorder %s18, 3
      %p113 = por %p111, %p112
      %p114 = scmp.ne.s32.totalorder %s106, %s109
      %p115 = scmp.eq.s32.totalorder %s18, 0
      %p116 = por %p114, %p115
      %p117 = scmp.ne.s32.totalorder %s106, %s109
      %p118 = scmp.eq.s32.totalorder %s23, 3
      %p119 = por %p117, %p118
      %p120 = scmp.ne.s32.totalorder %s109, %s110
      %p121 = scmp.eq.s32.totalorder %s23, 0
      %p122 = por %p120, %p121
      %p123 = scmp.ne.s32.totalorder %s109, %s110
      %p124 = scmp.eq.s32.totalorder %s24, 3
      %p125 = por %p123, %p124
      %p127 = scmp.ne.s32.totalorder %s110, %s126
      %p128 = scmp.eq.s32.totalorder %s24, 0
      %p129 = por %p127, %p128
      %s131 = sadd.s32 %s130, 1
      %p134 = scmp.eq.s32.totalorder %s18, 3
      %p135 = scmp.ne.s32.totalorder %s130, %s132
      %p136 = scmp.eq.s32.totalorder %s18, 0
      %p137 = por %p135, %p136
      %p138 = scmp.ne.s32.totalorder %s130, %s132
      %p139 = scmp.eq.s32.totalorder %s23, 3
      %p140 = por %p138, %p139
      %p141 = scmp.ne.s32.totalorder %s132, %s133
      %p142 = scmp.eq.s32.totalorder %s23, 0
      %p143 = por %p141, %p142
      %p144 = scmp.ne.s32.totalorder %s132, %s133
      %p145 = scmp.eq.s32.totalorder %s24, 3
      %p146 = por %p144, %p145
      %p148 = scmp.ne.s32.totalorder %s133, %s147
      %p149 = scmp.eq.s32.totalorder %s24, 0
      %p150 = por %p148, %p149
      %s152 = sadd.s32 %s151, 1
      %p155 = scmp.eq.s32.totalorder %s18, 3
      %p156 = scmp.ne.s32.totalorder %s151, %s153
      %p157 = scmp.eq.s32.totalorder %s18, 0
      %p158 = por %p156, %p157
      %p159 = scmp.ne.s32.totalorder %s151, %s153
      %p160 = scmp.eq.s32.totalorder %s23, 3
      %p161 = por %p159, %p160
      %p162 = scmp.ne.s32.totalorder %s153, %s154
      %p163 = scmp.eq.s32.totalorder %s23, 0
      %p164 = por %p162, %p163
      %p165 = scmp.ne.s32.totalorder %s153, %s154
      %p166 = scmp.eq.s32.totalorder %s24, 3
      %p167 = por %p165, %p166
      %p169 = scmp.ne.s32.totalorder %s154, %s168
      %p170 = scmp.eq.s32.totalorder %s24, 0
      %p171 = por %p169, %p170
      %s173 = sadd.s32 %s172, 1
      %p176 = scmp.eq.s32.totalorder %s18, 3
      %p177 = scmp.ne.s32.totalorder %s172, %s174
      %p178 = scmp.eq.s32.totalorder %s18, 0
      %p179 = por %p177, %p178
      %p180 = scmp.ne.s32.totalorder %s172, %s174
      %p181 = scmp.eq.s32.totalorder %s23, 3
      %p182 = por %p180, %p181
      %p183 = scmp.ne.s32.totalorder %s174, %s175
      %p184 = scmp.eq.s32.totalorder %s23, 0
      %p185 = por %p183, %p184
      %p186 = scmp.ne.s32.totalorder %s174, %s175
      %p187 = scmp.eq.s32.totalorder %s24, 3
      %p188 = por %p186, %p187
      %p190 = scmp.ne.s32.totalorder %s175, %s189
      %p191 = scmp.eq.s32.totalorder %s24, 0
      %p192 = por %p190, %p191
      %s194 = sadd.s32 %s193, 1
      %p197 = scmp.eq.s32.totalorder %s18, 3
      %p198 = scmp.ne.s32.totalorder %s193, %s195
      %p199 = scmp.eq.s32.totalorder %s18, 0
      %p200 = por %p198, %p199
      %p201 = scmp.ne.s32.totalorder %s193, %s195
      %p202 = scmp.eq.s32.totalorder %s23, 3
      %p203 = por %p201, %p202
      %p204 = scmp.ne.s32.totalorder %s195, %s196
      %p205 = scmp.eq.s32.totalorder %s23, 0
      %p206 = por %p204, %p205
      %p207 = scmp.ne.s32.totalorder %s195, %s196
      %p208 = scmp.eq.s32.totalorder %s24, 3
      %p209 = por %p207, %p208
      %p211 = scmp.ne.s32.totalorder %s196, %s210
      %p212 = scmp.eq.s32.totalorder %s24, 0
      %p213 = por %p211, %p212
      %s215 = sadd.s32 %s214, 1
      %p218 = scmp.eq.s32.totalorder %s18, 3
      %p219 = scmp.ne.s32.totalorder %s214, %s216
      %p220 = scmp.eq.s32.totalorder %s18, 0
      %p221 = por %p219, %p220
      %p222 = scmp.ne.s32.totalorder %s214, %s216
      %p223 = scmp.eq.s32.totalorder %s23, 3
      %p224 = por %p222, %p223
      %p225 = scmp.ne.s32.totalorder %s216, %s217
      %p226 = scmp.eq.s32.totalorder %s23, 0
      %p227 = por %p225, %p226
      %p228 = scmp.ne.s32.totalorder %s216, %s217
      %p229 = scmp.eq.s32.totalorder %s24, 3
      %p230 = por %p228, %p229
      %p232 = scmp.ne.s32.totalorder %s217, %s231
      %p233 = scmp.eq.s32.totalorder %s24, 0
      %p234 = por %p232, %p233
      %s235 = ssub.s32 %s18, %s25
      %p236 = scmp.eq.s32.totalorder %s235, 0
      %s238 = sadd.s32 %s237, 1
      %s239 = scalar_select %p236, %s237, %s238
      %p242 = pneg %p236
      %p243 = scmp.eq.s32.totalorder %s18, 3
      %p244 = por %p242, %p243
      %p245 = scmp.ne.s32.totalorder %s237, %s240
      %p246 = scmp.eq.s32.totalorder %s18, 0
      %p247 = por %p245, %p246
      %p248 = scmp.ne.s32.totalorder %s237, %s240
      %p249 = scmp.eq.s32.totalorder %s23, 3
      %p250 = por %p248, %p249
      %p251 = scmp.ne.s32.totalorder %s240, %s241
      %p252 = scmp.eq.s32.totalorder %s23, 0
      %p253 = por %p251, %p252
      %p254 = scmp.ne.s32.totalorder %s240, %s241
      %p255 = scmp.eq.s32.totalorder %s24, 3
      %p256 = por %p254, %p255
      %p258 = scmp.ne.s32.totalorder %s241, %s257
      %p259 = scmp.eq.s32.totalorder %s24, 0
      %p260 = por %p258, %p259
      %s261 = ssub.s32 %s18, %s25
      %p262 = scmp.eq.s32.totalorder %s261, 0
      %s264 = sadd.s32 %s263, 1
      %s265 = scalar_select %p262, %s263, %s264
      %p268 = pneg %p262
      %p269 = scmp.eq.s32.totalorder %s18, 3
      %p270 = por %p268, %p269
      %p271 = scmp.ne.s32.totalorder %s263, %s266
      %p272 = scmp.eq.s32.totalorder %s18, 0
      %p273 = por %p271, %p272
      %p274 = scmp.ne.s32.totalorder %s263, %s266
      %p275 = scmp.eq.s32.totalorder %s23, 3
      %p276 = por %p274, %p275
      %p277 = scmp.ne.s32.totalorder %s266, %s267
      %p278 = scmp.eq.s32.totalorder %s23, 0
      %p279 = por %p277, %p278
      %p280 = scmp.ne.s32.totalorder %s266, %s267
      %p281 = scmp.eq.s32.totalorder %s24, 3
      %p282 = por %p280, %p281
      %p284 = scmp.ne.s32.totalorder %s267, %s283
      %p285 = scmp.eq.s32.totalorder %s24, 0
      %p286 = por %p284, %p285
      %p287 = scmp.le.s32.totalorder 1, %s18
      %p288 = scmp.lt.s32.totalorder %s18, 5
      %p289 = pnand %p287, %p288
      %p290 = pneg %p289
      // Predicated region
      $region9: #{_lambda_.2} parent=5 // pred_check
        _
      $region10: #{_lambda_.2} parent=5 // pred_check_branch
        %292 = sbr.rel (%p289) target = $region12
      $region11: #{_lambda_.2} parent=5 // pred_region
        %s293 = ssub.s32 %s18, 1
        // Predicated region
        $region13: #{_lambda_.2} parent=11 // pred_check
          %p294 = pneg %p143
        $region14: #{_lambda_.2} parent=11 // pred_check_branch
          %296 = sbr.rel (%p294) target = $region16
        $region15: #{_lambda_.2} parent=11 // pred_region
          _
        $region16: #{_lambda_.2} parent=11 // pred_fallthru
          _
        // Predicated region
        $region17: #{_lambda_.2} parent=11 // pred_check
          %p297 = pneg %p164
        $region18: #{_lambda_.2} parent=11 // pred_check_branch
          %299 = sbr.rel (%p297) target = $region20
        $region19: #{_lambda_.2} parent=11 // pred_region
          _
        $region20: #{_lambda_.2} parent=11 // pred_fallthru
          _
        // Predicated region
        $region21: #{_lambda_.2} parent=11 // pred_check
          %p300 = pneg %p185
        $region22: #{_lambda_.2} parent=11 // pred_check_branch
          %302 = sbr.rel (%p300) target = $region24
        $region23: #{_lambda_.2} parent=11 // pred_region
          _
        $region24: #{_lambda_.2} parent=11 // pred_fallthru
          _
        // Predicated region
        $region25: #{_lambda_.2} parent=11 // pred_check
          %p303 = pneg %p206
        $region26: #{_lambda_.2} parent=11 // pred_check_branch
          %305 = sbr.rel (%p303) target = $region28
        $region27: #{_lambda_.2} parent=11 // pred_region
          _
        $region28: #{_lambda_.2} parent=11 // pred_fallthru
          _
        // Predicated region
        $region29: #{_lambda_.2} parent=11 // pred_check
          %p306 = pneg %p227
        $region30: #{_lambda_.2} parent=11 // pred_check_branch
          %308 = sbr.rel (%p306) target = $region32
        $region31: #{_lambda_.2} parent=11 // pred_region
          %s310 = ssub.s32 16, 16
          %311 = vsyncadd [#allocation5], %s310
          %s313 = sshll.u32 %s8, 4
          %s314 = int_to_ptr.vmem [resolvable:$true] %s313
          %316 = dma.vmem_to_smem %s314, 16, [#allocation4], [#allocation5]
        $region32: #{_lambda_.2} parent=11 // pred_fallthru
          _
      $region12: #{_lambda_.2} parent=5 // pred_fallthru
        _
      %p317 = scmp.lt.s32.totalorder %s18, 4
      // Predicated region
      $region33: #{_lambda_.2} parent=5 // pred_check
        %p318 = pneg %p317
      $region34: #{_lambda_.2} parent=5 // pred_check_branch
        %320 = sbr.rel (%p318) target = $region36
      $region35: #{_lambda_.2} parent=5 // pred_region
        // Predicated region
        $region37: #{_lambda_.2} parent=35 // pred_check
          %p321 = pneg %p38
        $region38: #{_lambda_.2} parent=35 // pred_check_branch
          %323 = sbr.rel (%p321) target = $region40
        $region39: #{_lambda_.2} parent=35 // pred_region
          %s324 = sand.u32 %s28, 1
          %s325 = sand.u32 %s28, 1
          %s326 = smul.addr %s325, 52
          %s327 = scalar_lea.vmem [#allocation2], %s326
          %s328 = smul.addr %s18, 4
          %s329 = scalar_lea.vmem %s0, %s328
          // Predicated region
          $region41: #{_lambda_.2} parent=39 // pred_check
            _
          $region42: #{_lambda_.2} parent=39 // pred_check_branch
            %331 = sbr.rel (0) target = $region44
          $region43: #{_lambda_.2} parent=39 // pred_region
            // Predicated region
            $region45: #{_lambda_.2} parent=43 // pred_check
              _
            $region46: #{_lambda_.2} parent=43 // pred_check_branch
              %333 = sbr.rel target = $region48
            $region47: #{_lambda_.2} parent=43 // pred_region
              // Predicated region
              $region60: #{_lambda_.2} parent=47 // pred_check
                _
              $region61: #{_lambda_.2} parent=47 // pred_check_branch
                %373 = sbr.rel (0) target = $region63
              $region62: #{_lambda_.2} parent=47 // pred_region
                loop: start=0, step=1, limit=1
                $region64: #{_lambda_.2} parent=62 // loop_pre_header
                  _
                $region65: #{_lambda_.2} parent=62 // loop_header
                  %s375 = sphi 0, %s379
                  %p376 = scmp.ge.s32.totalorder %s375, 1
                  %s380 = sphi %s329, %s329
                  %s381 = sphi %s327, %s327
                $region66: #{_lambda_.2} parent=62 // loop_header_branch
                  %378 = sbr.rel (%p376) target = $region70
                $region67: #{_lambda_.2} parent=62 // loop_body
                  _
                $region68: #{_lambda_.2} parent=62 // loop_footer
                  %s379 = sadd.s32 1, %s375
                $region69: #{_lambda_.2} parent=62 // loop_footer_branch
                  %374 = sbr.rel target = $region65
                $region70: #{_lambda_.2} parent=62 // loop_exit
                  _
                %s383 = ssub.s32 16, 1
                loop: start=0, step=1, limit=1
                $region71: #{_lambda_.2} parent=62 // loop_pre_header
                  _
                $region72: #{_lambda_.2} parent=62 // loop_header
                  %s385 = sphi 0, %s389
                  %p386 = scmp.ge.s32.totalorder %s385, 1
                  %s390 = sphi %s329, %s329
                  %s391 = sphi %s327, %s327
                $region73: #{_lambda_.2} parent=62 // loop_header_branch
                  %388 = sbr.rel (%p386) target = $region77
                $region74: #{_lambda_.2} parent=62 // loop_body
                  %v392 = vld [vmem:[%s390] sm:%s383]
                  %393 = vst [vmem:[%s391] sm:%s383] %v392
                  %v394 = vld [vmem:[%s390 + $0x10] sm:%s383]
                  %395 = vst [vmem:[%s391 + $0x4] sm:%s383] %v394
                  %v396 = vld [vmem:[%s390 + $0x20] sm:%s383]
                  %397 = vst [vmem:[%s391 + $0x8] sm:%s383] %v396
                  %v398 = vld [vmem:[%s390 + $0x30] sm:%s383]
                  %399 = vst [vmem:[%s391 + $0xc] sm:%s383] %v398
                  %v400 = vld [vmem:[%s390 + $0x40] sm:%s383]
                  %401 = vst [vmem:[%s391 + $0x10] sm:%s383] %v400
                  %v402 = vld [vmem:[%s390 + $0x50] sm:%s383]
                  %403 = vst [vmem:[%s391 + $0x14] sm:%s383] %v402
                  %v404 = vld [vmem:[%s390 + $0x60] sm:%s383]
                  %405 = vst [vmem:[%s391 + $0x18] sm:%s383] %v404
                  %v406 = vld [vmem:[%s390 + $0x70] sm:%s383]
                  %407 = vst [vmem:[%s391 + $0x1c] sm:%s383] %v406
                  %v408 = vld [vmem:[%s390 + $0x80] sm:%s383]
                  %409 = vst [vmem:[%s391 + $0x20] sm:%s383] %v408
                  %v410 = vld [vmem:[%s390 + $0x90] sm:%s383]
                  %411 = vst [vmem:[%s391 + $0x24] sm:%s383] %v410
                  %v412 = vld [vmem:[%s390 + $0xa0] sm:%s383]
                  %413 = vst [vmem:[%s391 + $0x28] sm:%s383] %v412
                  %v414 = vld [vmem:[%s390 + $0xb0] sm:%s383]
                  %415 = vst [vmem:[%s391 + $0x2c] sm:%s383] %v414
                  %v416 = vld [vmem:[%s390 + $0xc0] sm:%s383]
                  %417 = vst [vmem:[%s391 + $0x30] sm:%s383] %v416
                $region75: #{_lambda_.2} parent=62 // loop_footer
                  %s389 = sadd.s32 1, %s385
                $region76: #{_lambda_.2} parent=62 // loop_footer_branch
                  %384 = sbr.rel target = $region72
                $region77: #{_lambda_.2} parent=62 // loop_exit
                  _
              $region63: #{_lambda_.2} parent=47 // pred_fallthru
                _
            $region48: #{_lambda_.2} parent=43 // pred_fallthru
              _
            // Predicated region
            $region49: #{_lambda_.2} parent=43 // pred_check
              _
            $region50: #{_lambda_.2} parent=43 // pred_check_branch
              %335 = sbr.rel (0) target = $region52
            $region51: #{_lambda_.2} parent=43 // pred_region
              %s337 = ssub.s32 16, 1
              loop: start=0, step=1, limit=1
              $region53: #{_lambda_.2} parent=51 // loop_pre_header
                _
              $region54: #{_lambda_.2} parent=51 // loop_header
                %s339 = sphi 0, %s343
                %p340 = scmp.ge.s32.totalorder %s339, 1
                %s344 = sphi %s329, %s329
                %s345 = sphi %s327, %s327
              $region55: #{_lambda_.2} parent=51 // loop_header_branch
                %342 = sbr.rel (%p340) target = $region59
              $region56: #{_lambda_.2} parent=51 // loop_body
                %v346 = vld [vmem:[%s344] sm:%s337]
                %347 = vst [vmem:[%s345] sm:%s337] %v346
                %v348 = vld [vmem:[%s344 + $0x10] sm:%s337]
                %349 = vst [vmem:[%s345 + $0x4] sm:%s337] %v348
                %v350 = vld [vmem:[%s344 + $0x20] sm:%s337]
                %351 = vst [vmem:[%s345 + $0x8] sm:%s337] %v350
                %v352 = vld [vmem:[%s344 + $0x30] sm:%s337]
                %353 = vst [vmem:[%s345 + $0xc] sm:%s337] %v352
                %v354 = vld [vmem:[%s344 + $0x40] sm:%s337]
                %355 = vst [vmem:[%s345 + $0x10] sm:%s337] %v354
                %v356 = vld [vmem:[%s344 + $0x50] sm:%s337]
                %357 = vst [vmem:[%s345 + $0x14] sm:%s337] %v356
                %v358 = vld [vmem:[%s344 + $0x60] sm:%s337]
                %359 = vst [vmem:[%s345 + $0x18] sm:%s337] %v358
                %v360 = vld [vmem:[%s344 + $0x70] sm:%s337]
                %361 = vst [vmem:[%s345 + $0x1c] sm:%s337] %v360
                %v362 = vld [vmem:[%s344 + $0x80] sm:%s337]
                %363 = vst [vmem:[%s345 + $0x20] sm:%s337] %v362
                %v364 = vld [vmem:[%s344 + $0x90] sm:%s337]
                %365 = vst [vmem:[%s345 + $0x24] sm:%s337] %v364
                %v366 = vld [vmem:[%s344 + $0xa0] sm:%s337]
                %367 = vst [vmem:[%s345 + $0x28] sm:%s337] %v366
                %v368 = vld [vmem:[%s344 + $0xb0] sm:%s337]
                %369 = vst [vmem:[%s345 + $0x2c] sm:%s337] %v368
                %v370 = vld [vmem:[%s344 + $0xc0] sm:%s337]
                %371 = vst [vmem:[%s345 + $0x30] sm:%s337] %v370
              $region57: #{_lambda_.2} parent=51 // loop_footer
                %s343 = sadd.s32 1, %s339
              $region58: #{_lambda_.2} parent=51 // loop_footer_branch
                %338 = sbr.rel target = $region54
              $region59: #{_lambda_.2} parent=51 // loop_exit
                _
            $region52: #{_lambda_.2} parent=43 // pred_fallthru
              _
          $region44: #{_lambda_.2} parent=39 // pred_fallthru
            _
          %418 = vnop
        $region40: #{_lambda_.2} parent=35 // pred_fallthru
          _
        // Predicated region
        $region78: #{_lambda_.2} parent=35 // pred_check
          %p419 = pneg %p64
        $region79: #{_lambda_.2} parent=35 // pred_check_branch
          %421 = sbr.rel (%p419) target = $region81
        $region80: #{_lambda_.2} parent=35 // pred_region
          %s422 = sand.u32 %s54, 1
          %s423 = sand.u32 %s54, 1
          %s424 = smul.addr %s423, 52
          %s425 = scalar_lea.vmem [#allocation3], %s424
          %s426 = smul.addr %s18, 4
          %s427 = scalar_lea.vmem %s1, %s426
          // Predicated region
          $region82: #{_lambda_.2} parent=80 // pred_check
            _
          $region83: #{_lambda_.2} parent=80 // pred_check_branch
            %429 = sbr.rel (0) target = $region85
          $region84: #{_lambda_.2} parent=80 // pred_region
            // Predicated region
            $region86: #{_lambda_.2} parent=84 // pred_check
              _
            $region87: #{_lambda_.2} parent=84 // pred_check_branch
              %431 = sbr.rel target = $region89
            $region88: #{_lambda_.2} parent=84 // pred_region
              // Predicated region
              $region101: #{_lambda_.2} parent=88 // pred_check
                _
              $region102: #{_lambda_.2} parent=88 // pred_check_branch
                %471 = sbr.rel (0) target = $region104
              $region103: #{_lambda_.2} parent=88 // pred_region
                loop: start=0, step=1, limit=1
                $region105: #{_lambda_.2} parent=103 // loop_pre_header
                  _
                $region106: #{_lambda_.2} parent=103 // loop_header
                  %s473 = sphi 0, %s477
                  %p474 = scmp.ge.s32.totalorder %s473, 1
                  %s478 = sphi %s427, %s427
                  %s479 = sphi %s425, %s425
                $region107: #{_lambda_.2} parent=103 // loop_header_branch
                  %476 = sbr.rel (%p474) target = $region111
                $region108: #{_lambda_.2} parent=103 // loop_body
                  _
                $region109: #{_lambda_.2} parent=103 // loop_footer
                  %s477 = sadd.s32 1, %s473
                $region110: #{_lambda_.2} parent=103 // loop_footer_branch
                  %472 = sbr.rel target = $region106
                $region111: #{_lambda_.2} parent=103 // loop_exit
                  _
                %s481 = ssub.s32 16, 1
                loop: start=0, step=1, limit=1
                $region112: #{_lambda_.2} parent=103 // loop_pre_header
                  _
                $region113: #{_lambda_.2} parent=103 // loop_header
                  %s483 = sphi 0, %s487
                  %p484 = scmp.ge.s32.totalorder %s483, 1
                  %s488 = sphi %s427, %s427
                  %s489 = sphi %s425, %s425
                $region114: #{_lambda_.2} parent=103 // loop_header_branch
                  %486 = sbr.rel (%p484) target = $region118
                $region115: #{_lambda_.2} parent=103 // loop_body
                  %v490 = vld [vmem:[%s488] sm:%s481]
                  %491 = vst [vmem:[%s489] sm:%s481] %v490
                  %v492 = vld [vmem:[%s488 + $0x10] sm:%s481]
                  %493 = vst [vmem:[%s489 + $0x4] sm:%s481] %v492
                  %v494 = vld [vmem:[%s488 + $0x20] sm:%s481]
                  %495 = vst [vmem:[%s489 + $0x8] sm:%s481] %v494
                  %v496 = vld [vmem:[%s488 + $0x30] sm:%s481]
                  %497 = vst [vmem:[%s489 + $0xc] sm:%s481] %v496
                  %v498 = vld [vmem:[%s488 + $0x40] sm:%s481]
                  %499 = vst [vmem:[%s489 + $0x10] sm:%s481] %v498
                  %v500 = vld [vmem:[%s488 + $0x50] sm:%s481]
                  %501 = vst [vmem:[%s489 + $0x14] sm:%s481] %v500
                  %v502 = vld [vmem:[%s488 + $0x60] sm:%s481]
                  %503 = vst [vmem:[%s489 + $0x18] sm:%s481] %v502
                  %v504 = vld [vmem:[%s488 + $0x70] sm:%s481]
                  %505 = vst [vmem:[%s489 + $0x1c] sm:%s481] %v504
                  %v506 = vld [vmem:[%s488 + $0x80] sm:%s481]
                  %507 = vst [vmem:[%s489 + $0x20] sm:%s481] %v506
                  %v508 = vld [vmem:[%s488 + $0x90] sm:%s481]
                  %509 = vst [vmem:[%s489 + $0x24] sm:%s481] %v508
                  %v510 = vld [vmem:[%s488 + $0xa0] sm:%s481]
                  %511 = vst [vmem:[%s489 + $0x28] sm:%s481] %v510
                  %v512 = vld [vmem:[%s488 + $0xb0] sm:%s481]
                  %513 = vst [vmem:[%s489 + $0x2c] sm:%s481] %v512
                  %v514 = vld [vmem:[%s488 + $0xc0] sm:%s481]
                  %515 = vst [vmem:[%s489 + $0x30] sm:%s481] %v514
                $region116: #{_lambda_.2} parent=103 // loop_footer
                  %s487 = sadd.s32 1, %s483
                $region117: #{_lambda_.2} parent=103 // loop_footer_branch
                  %482 = sbr.rel target = $region113
                $region118: #{_lambda_.2} parent=103 // loop_exit
                  _
              $region104: #{_lambda_.2} parent=88 // pred_fallthru
                _
            $region89: #{_lambda_.2} parent=84 // pred_fallthru
              _
            // Predicated region
            $region90: #{_lambda_.2} parent=84 // pred_check
              _
            $region91: #{_lambda_.2} parent=84 // pred_check_branch
              %433 = sbr.rel (0) target = $region93
            $region92: #{_lambda_.2} parent=84 // pred_region
              %s435 = ssub.s32 16, 1
              loop: start=0, step=1, limit=1
              $region94: #{_lambda_.2} parent=92 // loop_pre_header
                _
              $region95: #{_lambda_.2} parent=92 // loop_header
                %s437 = sphi 0, %s441
                %p438 = scmp.ge.s32.totalorder %s437, 1
                %s442 = sphi %s427, %s427
                %s443 = sphi %s425, %s425
              $region96: #{_lambda_.2} parent=92 // loop_header_branch
                %440 = sbr.rel (%p438) target = $region100
              $region97: #{_lambda_.2} parent=92 // loop_body
                %v444 = vld [vmem:[%s442] sm:%s435]
                %445 = vst [vmem:[%s443] sm:%s435] %v444
                %v446 = vld [vmem:[%s442 + $0x10] sm:%s435]
                %447 = vst [vmem:[%s443 + $0x4] sm:%s435] %v446
                %v448 = vld [vmem:[%s442 + $0x20] sm:%s435]
                %449 = vst [vmem:[%s443 + $0x8] sm:%s435] %v448
                %v450 = vld [vmem:[%s442 + $0x30] sm:%s435]
                %451 = vst [vmem:[%s443 + $0xc] sm:%s435] %v450
                %v452 = vld [vmem:[%s442 + $0x40] sm:%s435]
                %453 = vst [vmem:[%s443 + $0x10] sm:%s435] %v452
                %v454 = vld [vmem:[%s442 + $0x50] sm:%s435]
                %455 = vst [vmem:[%s443 + $0x14] sm:%s435] %v454
                %v456 = vld [vmem:[%s442 + $0x60] sm:%s435]
                %457 = vst [vmem:[%s443 + $0x18] sm:%s435] %v456
                %v458 = vld [vmem:[%s442 + $0x70] sm:%s435]
                %459 = vst [vmem:[%s443 + $0x1c] sm:%s435] %v458
                %v460 = vld [vmem:[%s442 + $0x80] sm:%s435]
                %461 = vst [vmem:[%s443 + $0x20] sm:%s435] %v460
                %v462 = vld [vmem:[%s442 + $0x90] sm:%s435]
                %463 = vst [vmem:[%s443 + $0x24] sm:%s435] %v462
                %v464 = vld [vmem:[%s442 + $0xa0] sm:%s435]
                %465 = vst [vmem:[%s443 + $0x28] sm:%s435] %v464
                %v466 = vld [vmem:[%s442 + $0xb0] sm:%s435]
                %467 = vst [vmem:[%s443 + $0x2c] sm:%s435] %v466
                %v468 = vld [vmem:[%s442 + $0xc0] sm:%s435]
                %469 = vst [vmem:[%s443 + $0x30] sm:%s435] %v468
              $region98: #{_lambda_.2} parent=92 // loop_footer
                %s441 = sadd.s32 1, %s437
              $region99: #{_lambda_.2} parent=92 // loop_footer_branch
                %436 = sbr.rel target = $region95
              $region100: #{_lambda_.2} parent=92 // loop_exit
                _
            $region93: #{_lambda_.2} parent=84 // pred_fallthru
              _
          $region85: #{_lambda_.2} parent=80 // pred_fallthru
            _
          %516 = vnop
        $region81: #{_lambda_.2} parent=35 // pred_fallthru
          _
        // Predicated region
        $region119: #{_lambda_.2} parent=35 // pred_check
          %p517 = pneg %p90
        $region120: #{_lambda_.2} parent=35 // pred_check_branch
          %519 = sbr.rel (%p517) target = $region122
        $region121: #{_lambda_.2} parent=35 // pred_region
          %p520 = scmp.lt.s32.totalorder %s18, 3
          %s521 = scalar_select %p520, %s18, 3
          %s522 = smul.addr %s521, 4
          %s523 = scalar_lea.vmem %s2, %s522
        $region122: #{_lambda_.2} parent=35 // pred_fallthru
          _
        // Predicated region
        $region123: #{_lambda_.2} parent=35 // pred_check
          %p524 = pneg %p116
        $region124: #{_lambda_.2} parent=35 // pred_check_branch
          %526 = sbr.rel (%p524) target = $region126
        $region125: #{_lambda_.2} parent=35 // pred_region
          %p527 = scmp.lt.s32.totalorder %s18, 3
          %s528 = scalar_select %p527, %s18, 3
          %s529 = smul.addr %s528, 2
          %s530 = scalar_lea.vmem %s3, %s529
        $region126: #{_lambda_.2} parent=35 // pred_fallthru
          _
      $region36: #{_lambda_.2} parent=5 // pred_fallthru
        _
      %p531 = scmp.le.s32.totalorder 1, %s18
      %p532 = scmp.lt.s32.totalorder %s18, 5
      %p533 = pnand %p531, %p532
      %p534 = pneg %p533
      // Predicated region
      $region127: #{_lambda_.2} parent=5 // pred_check
        _
      $region128: #{_lambda_.2} parent=5 // pred_check_branch
        %536 = sbr.rel (%p533) target = $region130
      $region129: #{_lambda_.2} parent=5 // pred_region
        %s537 = ssub.s32 %s18, 1
        %s538 = sand.u32 %s31, 1
        %s539 = sand.u32 %s31, 1
        %s540 = smul.addr %s539, 52
        %s541 = scalar_lea.vmem [#allocation2], %s540
        // Predicated region
        $region131: #{_lambda_.2} parent=129 // pred_check
          %p542 = pneg %p44
        $region132: #{_lambda_.2} parent=129 // pred_check_branch
          %544 = sbr.rel (%p542) target = $region134
        $region133: #{_lambda_.2} parent=129 // pred_region
          _
        $region134: #{_lambda_.2} parent=129 // pred_fallthru
          _
        %s545 = sand.u32 %s57, 1
        %s546 = sand.u32 %s57, 1
        %s547 = smul.addr %s546, 52
        %s548 = scalar_lea.vmem [#allocation3], %s547
        // Predicated region
        $region135: #{_lambda_.2} parent=129 // pred_check
          %p549 = pneg %p70
        $region136: #{_lambda_.2} parent=129 // pred_check_branch
          %551 = sbr.rel (%p549) target = $region138
        $region137: #{_lambda_.2} parent=129 // pred_region
          _
        $region138: #{_lambda_.2} parent=129 // pred_fallthru
          _
        // Predicated region
        $region139: #{_lambda_.2} parent=129 // pred_check
          %p552 = pneg %p227
        $region140: #{_lambda_.2} parent=129 // pred_check_branch
          %554 = sbr.rel (%p552) target = $region142
        $region141: #{_lambda_.2} parent=129 // pred_region
          %555 = dma.done [#allocation5], 16
        $region142: #{_lambda_.2} parent=129 // pred_fallthru
          _
        %556 = sfence
        %s557 = sand.u32 %s31, 1
        %s558 = sand.u32 %s31, 1
        %s559 = smul.addr %s558, 52
        %s560 = scalar_lea.vmem [#allocation2], %s559
        %p561 = pneg %p44
        %p562 = pneg %p41
        %s563 = sand.u32 %s57, 1
        %s564 = sand.u32 %s57, 1
        %s565 = smul.addr %s564, 52
        %s566 = scalar_lea.vmem [#allocation3], %s565
        %p567 = pneg %p70
        %p568 = pneg %p67
        %p569 = scmp.lt.s32.totalorder %s23, 3
        %s570 = scalar_select %p569, %s23, 3
        %s571 = smul.addr %s570, 4
        %s572 = scalar_lea.vmem %s2, %s571
        %p573 = pneg %p96
        %p574 = pneg %p93
        %p575 = scmp.lt.s32.totalorder %s23, 3
        %s576 = scalar_select %p575, %s23, 3
        %s577 = smul.addr %s576, 2
        %s578 = scalar_lea.vmem %s3, %s577
        %p579 = pneg %p122
        %p580 = pneg %p119
        %p581 = pneg %p143
        %p582 = pneg %p140
        %p583 = pneg %p164
        %p584 = pneg %p161
        %p585 = pneg %p185
        %p586 = pneg %p182
        %p587 = pneg %p206
        %p588 = pneg %p203
        %p589 = pneg %p227
        %p590 = pneg %p224
        %p591 = pneg %p253
        %p592 = pneg %p250
        %p593 = scmp.lt.s32.totalorder %s23, 3
        %s594 = scalar_select %p593, %s23, 3
        %s595 = smul.addr %s594, 4
        %s596 = scalar_lea.vmem %s9, %s595
        %p597 = pneg %p279
        %p598 = pneg %p276
        %p599 = scmp.lt.s32.totalorder %s23, 3
        %s600 = scalar_select %p599, %s23, 3
        %s601 = smul.addr %s600, 4
        %s602 = scalar_lea.vmem %s10, %s601
        %p603 = scmp.lt.s32.totalorder %s23, 3
        %s604 = scalar_select %p603, %s23, 3
        %s605 = smul.addr %s604, 4
        %s606 = scalar_lea.vmem %s2, %s605
        %p607 = scmp.lt.s32.totalorder %s23, 3
        %s608 = scalar_select %p607, %s23, 3
        %s609 = smul.addr %s608, 2
        %s610 = scalar_lea.vmem %s3, %s609
        %p611 = scmp.lt.s32.totalorder %s23, 3
        %s612 = scalar_select %p611, %s23, 3
        %s613 = smul.addr %s612, 4
        %s614 = scalar_lea.vmem %s9, %s613
        %p615 = scmp.lt.s32.totalorder %s23, 3
        %s616 = scalar_select %p615, %s23, 3
        %s617 = smul.addr %s616, 4
        %s618 = scalar_lea.vmem %s10, %s617
        %v620 = vld [vmem:[%s541] sm:$0xf]
        %v621 = vld [vmem:[%s541 + $0x4] sm:$0xf]
        %v622 = vld [vmem:[%s541 + $0x8] sm:$0xf]
        %v623 = vld [vmem:[%s541 + $0xc] sm:$0xf]
        %v624 = vld [vmem:[%s541 + $0x10] sm:$0xf]
        %v625 = vld [vmem:[%s541 + $0x14] sm:$0xf]
        %v626 = vld [vmem:[%s541 + $0x18] sm:$0xf]
        %v627 = vld [vmem:[%s541 + $0x1c] sm:$0xf]
        %v628 = vld [vmem:[%s541 + $0x20] sm:$0xf]
        %v629 = vld [vmem:[%s541 + $0x24] sm:$0xf]
        %v630 = vld [vmem:[%s541 + $0x28] sm:$0xf]
        %v631 = vld [vmem:[%s541 + $0x2c] sm:$0xf]
        %v632 = vld [vmem:[%s541 + $0x30] sm:$0x3]
        %v633 = vld [vmem:[%s548] sm:$0xf]
        %v634 = vld [vmem:[%s548 + $0x4] sm:$0xf]
        %v635 = vld [vmem:[%s548 + $0x8] sm:$0xf]
        %v636 = vld [vmem:[%s548 + $0xc] sm:$0xf]
        %v637 = vld [vmem:[%s548 + $0x10] sm:$0xf]
        %v638 = vld [vmem:[%s548 + $0x14] sm:$0xf]
        %v639 = vld [vmem:[%s548 + $0x18] sm:$0xf]
        %v640 = vld [vmem:[%s548 + $0x1c] sm:$0xf]
        %v641 = vld [vmem:[%s548 + $0x20] sm:$0xf]
        %v642 = vld [vmem:[%s548 + $0x24] sm:$0xf]
        %v643 = vld [vmem:[%s548 + $0x28] sm:$0xf]
        %v644 = vld [vmem:[%s548 + $0x2c] sm:$0xf]
        %v645 = vld [vmem:[%s548 + $0x30] sm:$0x3]
        %v646 = vmax.bf16 %v620, 0
        %v647 = vmax.bf16 %v621, 0
        %v648 = vmax.bf16 %v622, 0
        %v649 = vmax.bf16 %v623, 0
        %v650 = vmax.bf16 %v624, 0
        %v651 = vmax.bf16 %v625, 0
        %v652 = vmax.bf16 %v626, 0
        %v653 = vmax.bf16 %v627, 0
        %v654 = vmax.bf16 %v628, 0
        %v655 = vmax.bf16 %v629, 0
        %v656 = vmax.bf16 %v630, 0
        %v657 = vmax.bf16 %v631, 0
        %v658 = vmax.bf16 %v632, 0
        %v659 = vmax.bf16 %v633, 0
        %v660 = vmax.bf16 %v634, 0
        %v661 = vmax.bf16 %v635, 0
        %v662 = vmax.bf16 %v636, 0
        %v663 = vmax.bf16 %v637, 0
        %v664 = vmax.bf16 %v638, 0
        %v665 = vmax.bf16 %v639, 0
        %v666 = vmax.bf16 %v640, 0
        %v667 = vmax.bf16 %v641, 0
        %v668 = vmax.bf16 %v642, 0
        %v669 = vmax.bf16 %v643, 0
        %v670 = vmax.bf16 %v644, 0
        %v671 = vmax.bf16 %v645, 0
        %v672 = vld [vmem:[%s4] sm:$0xf]
        %v673 = vld [vmem:[%s5] sm:$0xff]
        %675 = vset.pattern.permute.xlu0 0
        %676 = vperm.xlu0 %675, %v673
        %v677 = vpop.permute.xlu0 %676
        %v692 = vunpack.c.l.b16 %v646
        %v693 = vunpack.c.l.b16 %v647
        %v694 = vunpack.c.l.b16 %v648
        %v695 = vunpack.c.l.b16 %v649
        %v696 = vunpack.c.l.b16 %v650
        %v697 = vunpack.c.l.b16 %v651
        %v698 = vunpack.c.l.b16 %v652
        %v699 = vunpack.c.l.b16 %v653
        %v700 = vunpack.c.l.b16 %v654
        %v701 = vunpack.c.l.b16 %v655
        %v702 = vunpack.c.l.b16 %v656
        %v703 = vunpack.c.l.b16 %v657
        %v704 = vunpack.c.l.b16 %v658
        %v705 = vpack.c.b16 %v693, %v692
        %v706 = vpack.c.b16 %v695, %v694
        %v707 = vpack.c.b16 %v697, %v696
        %v708 = vpack.c.b16 %v699, %v698
        %v709 = vpack.c.b16 %v701, %v700
        %v710 = vpack.c.b16 %v703, %v702
        %v711 = vpack.c.b16 %v704, %v704
        %vm718 = vcmask 818176
        %v720 = vsel %vm718, %v672, 0
        %vm722 = vcmask 1041408
        %v724 = vsel %vm722, %v711, 0
        %726 = vmatprep.subr.bf16.mxu0 0
        %727 = vmatpush1.bf16.msra.mxu0 0
        %728 = vmatprep.subr.bf16.mxu0 0
        %729 = vmatpush1.bf16.msra.mxu0 %v724
        %730 = vmatprep.subr.bf16.mxu0 0
        %731 = vmatpush1.bf16.msra.mxu0 %v710
        %732 = vmatprep.subr.bf16.mxu0 0
        %733 = vmatpush1.bf16.msra.mxu0 %v709
        %734 = vmatprep.subr.bf16.mxu0 0
        %735 = vmatpush1.bf16.msra.mxu0 %v708
        %736 = vmatprep.subr.bf16.mxu0 0
        %737 = vmatpush1.bf16.msra.mxu0 %v707
        %738 = vmatprep.subr.bf16.mxu0 0
        %739 = vmatpush1.bf16.msra.mxu0 %v706
        %740 = vmatprep.subr.bf16.mxu0 0
        %741 = vmatpush1.bf16.msra.mxu0 %v705
        %742 = vmatprep.subr.bf16.mxu0 0
        %743 = vmatpush2.bf16.msra.mxu0 0
        %744 = vmatprep.subr.bf16.mxu0 0
        %745 = vmatpush2.bf16.msra.mxu0 0
        %746 = vmatprep.subr.bf16.mxu0 0
        %747 = vmatpush2.bf16.msra.mxu0 0
        %748 = vmatprep.subr.bf16.mxu0 0
        %749 = vmatpush2.bf16.msra.mxu0 0
        %750 = vmatprep.subr.bf16.mxu0 0
        %751 = vmatpush2.bf16.msra.mxu0 0
        %752 = vmatprep.subr.bf16.mxu0 0
        %753 = vmatpush2.bf16.msra.mxu0 0
        %754 = vmatprep.subr.bf16.mxu0 0
        %755 = vmatpush2.bf16.msra.mxu0 0
        %756 = vmatprep.subr.bf16.mxu0 0
        %757 = vmatpush2.bf16.msra.mxu0 0
        %758 = vmatprep.mubr.bf16.mxu0 0
        %759 = vmatmul.mubr.bf16.gmra.mxu0 %v720
        %v760 = vpop.f32.mrf.mxu0
        %v761 = vadd.f32 %v677, %v760
        %v762 = vpop.f32.mrf.mxu0
        %v763 = vpop.f32.mrf.mxu0
        %v764 = vpop.f32.mrf.mxu0
        %765 = vdwg.mxu0
        %v766 = vmax.f32 %v761, 0.0
        %v767 = vpack.c.bf16 %v766, %v766
        %768 = vst [vmem:[%s618] sm:$0xf] %v767
        %v769 = vld [vmem:[%s6] sm:$0x3]
        %v770 = vld [vmem:[%s7] sm:$0xf]
        %772 = vset.pattern.permute.xlu0 0
        %773 = vperm.xlu0 %772, %v770
        %v774 = vpop.permute.xlu0 %773
        %v789 = vunpack.c.l.b16 %v659
        %v790 = vunpack.c.l.b16 %v660
        %v791 = vunpack.c.l.b16 %v661
        %v792 = vunpack.c.l.b16 %v662
        %v793 = vunpack.c.l.b16 %v663
        %v794 = vunpack.c.l.b16 %v664
        %v795 = vunpack.c.l.b16 %v665
        %v796 = vunpack.c.l.b16 %v666
        %v797 = vunpack.c.l.b16 %v667
        %v798 = vunpack.c.l.b16 %v668
        %v799 = vunpack.c.l.b16 %v669
        %v800 = vunpack.c.l.b16 %v670
        %v801 = vunpack.c.l.b16 %v671
        %v802 = vpack.c.b16 %v790, %v789
        %v803 = vpack.c.b16 %v792, %v791
        %v804 = vpack.c.b16 %v794, %v793
        %v805 = vpack.c.b16 %v796, %v795
        %v806 = vpack.c.b16 %v798, %v797
        %v807 = vpack.c.b16 %v800, %v799
        %v808 = vpack.c.b16 %v801, %v801
        %v816 = vsel %vm718, %v769, 0
        %v819 = vsel %vm722, %v808, 0
        %821 = vmatprep.subr.bf16.mxu0 0
        %822 = vmatpush1.bf16.msra.mxu0 0
        %823 = vmatprep.subr.bf16.mxu0 0
        %824 = vmatpush1.bf16.msra.mxu0 %v819
        %825 = vmatprep.subr.bf16.mxu0 0
        %826 = vmatpush1.bf16.msra.mxu0 %v807
        %827 = vmatprep.subr.bf16.mxu0 0
        %828 = vmatpush1.bf16.msra.mxu0 %v806
        %829 = vmatprep.subr.bf16.mxu0 0
        %830 = vmatpush1.bf16.msra.mxu0 %v805
        %831 = vmatprep.subr.bf16.mxu0 0
        %832 = vmatpush1.bf16.msra.mxu0 %v804
        %833 = vmatprep.subr.bf16.mxu0 0
        %834 = vmatpush1.bf16.msra.mxu0 %v803
        %835 = vmatprep.subr.bf16.mxu0 0
        %836 = vmatpush1.bf16.msra.mxu0 %v802
        %837 = vmatprep.subr.bf16.mxu0 0
        %838 = vmatpush2.bf16.msra.mxu0 0
        %839 = vmatprep.subr.bf16.mxu0 0
        %840 = vmatpush2.bf16.msra.mxu0 0
        %841 = vmatprep.subr.bf16.mxu0 0
        %842 = vmatpush2.bf16.msra.mxu0 0
        %843 = vmatprep.subr.bf16.mxu0 0
        %844 = vmatpush2.bf16.msra.mxu0 0
        %845 = vmatprep.subr.bf16.mxu0 0
        %846 = vmatpush2.bf16.msra.mxu0 0
        %847 = vmatprep.subr.bf16.mxu0 0
        %848 = vmatpush2.bf16.msra.mxu0 0
        %849 = vmatprep.subr.bf16.mxu0 0
        %850 = vmatpush2.bf16.msra.mxu0 0
        %851 = vmatprep.subr.bf16.mxu0 0
        %852 = vmatpush2.bf16.msra.mxu0 0
        %853 = vmatprep.mubr.bf16.mxu0 0
        %854 = vmatmul.mubr.bf16.gmra.mxu0 %v816
        %v855 = vpop.f32.mrf.mxu0
        %v856 = vadd.f32 %v774, %v855
        %v857 = vpop.f32.mrf.mxu0
        %v858 = vpop.f32.mrf.mxu0
        %v859 = vpop.f32.mrf.mxu0
        %860 = vdwg.mxu0
        %v861 = vld [vmem:[%s610] sm:$0x1]
        %v862 = vld [vmem:[%s610 + $0x1] sm:$0x1]
        %v863 = vld [vmem:[%s541 + $0xc] sm:$0x3]
        %v864 = vunpack.c.l.bf16 %v863
        %v865 = vadd.s32 %v861, 4294967295
        %vm866 = vcmp.ge.s32.totalorder %v865, 0
        %vm867 = vcmp.lt.s32.totalorder %v865, 16
        %vm868 = vmand %vm866, %vm867
        %v869 = vadd.s32 %v862, 4294967295
        %vm870 = vcmp.ge.s32.totalorder %v869, 0
        %vm871 = vmand %vm868, %vm870
        %vm872 = vcmp.lt.s32.totalorder %v869, 16
        %vm873 = vmand %vm871, %vm872
        %v874 = vsel %vm873, 1, 0
        %v875 = vlaneseq
        %v876 = vshrl.u32 %v875, 7
        %v877 = vsub.s32 0, %v876
        %v878 = vrot.slane %v874, %v877
        %vm879 = vcmp.eq.s32.totalorder %v878, 1
        %v880 = vsel %vm879, %v864, -3e+38
        %v881 = vmax.f32 %v880, -3e+38
        %v882 = vadd.f32 %v864, 0.0
        %v883 = vcvt.s32.f32 %v874
        %v884 = vadd.f32 %v883, 0.0
        %v885 = vld [vmem:[%s541 + $0xc] sm:$0xc]
        %v886 = vunpack.c.l.bf16 %v885
        %vm887 = vcmp.ge.s32.totalorder %v862, 0
        %vm888 = vmand %vm868, %vm887
        %vm889 = vcmp.lt.s32.totalorder %v862, 16
        %vm890 = vmand %vm888, %vm889
        %v891 = vsel %vm890, 1, 0
        %v892 = vlaneseq
        %v893 = vshrl.u32 %v892, 7
        %v894 = vsub.s32 0, %v893
        %v895 = vrot.slane %v891, %v894
        %vm896 = vcmp.eq.s32.totalorder %v895, 1
        %v897 = vsel %vm896, %v886, -3e+38
        %v899 = vrot.slane %v897, 4
        %v901 = vmax.f32 %v881, %v899
        %v903 = vrot.slane %v886, 4
        %v905 = vadd.f32 %v882, %v903
        %v906 = vcvt.s32.f32 %v891
        %v907 = vadd.f32 %v884, %v906
        %v908 = vld [vmem:[%s541 + $0x10] sm:$0x3]
        %v909 = vunpack.c.l.bf16 %v908
        %v910 = vadd.s32 %v862, 1
        %vm911 = vcmp.ge.s32.totalorder %v910, 0
        %vm912 = vmand %vm868, %vm911
        %vm913 = vcmp.lt.s32.totalorder %v910, 16
        %vm914 = vmand %vm912, %vm913
        %v915 = vsel %vm914, 1, 0
        %v916 = vlaneseq
        %v917 = vshrl.u32 %v916, 7
        %v918 = vsub.s32 0, %v917
        %v919 = vrot.slane %v915, %v918
        %vm920 = vcmp.eq.s32.totalorder %v919, 1
        %v921 = vsel %vm920, %v909, -3e+38
        %v922 = vmax.f32 %v901, %v921
        %v923 = vadd.f32 %v905, %v909
        %v924 = vcvt.s32.f32 %v915
        %v925 = vadd.f32 %v907, %v924
        %v926 = vld [vmem:[%s541 + $0x14] sm:$0xc]
        %v927 = vunpack.c.l.bf16 %v926
        %vm928 = vcmp.ge.s32.totalorder %v861, 0
        %vm929 = vcmp.lt.s32.totalorder %v861, 16
        %vm930 = vmand %vm928, %vm929
        %vm931 = vmand %vm930, %vm870
        %vm932 = vmand %vm931, %vm872
        %v933 = vsel %vm932, 1, 0
        %v934 = vlaneseq
        %v935 = vshrl.u32 %v934, 7
        %v936 = vsub.s32 0, %v935
        %v937 = vrot.slane %v933, %v936
        %vm938 = vcmp.eq.s32.totalorder %v937, 1
        %v939 = vsel %vm938, %v927, -3e+38
        %v941 = vrot.slane %v939, 4
        %v943 = vmax.f32 %v922, %v941
        %v945 = vrot.slane %v927, 4
        %v947 = vadd.f32 %v923, %v945
        %v948 = vcvt.s32.f32 %v933
        %v949 = vadd.f32 %v925, %v948
        %v950 = vld [vmem:[%s541 + $0x18] sm:$0x3]
        %v951 = vunpack.c.l.bf16 %v950
        %vm952 = vmand %vm930, %vm887
        %vm953 = vmand %vm952, %vm889
        %v954 = vsel %vm953, 1, 0
        %v955 = vlaneseq
        %v956 = vshrl.u32 %v955, 7
        %v957 = vsub.s32 0, %v956
        %v958 = vrot.slane %v954, %v957
        %vm959 = vcmp.eq.s32.totalorder %v958, 1
        %v960 = vsel %vm959, %v951, -3e+38
        %v961 = vmax.f32 %v943, %v960
        %v962 = vadd.f32 %v947, %v951
        %v963 = vcvt.s32.f32 %v954
        %v964 = vadd.f32 %v949, %v963
        %v965 = vld [vmem:[%s541 + $0x18] sm:$0xc]
        %v966 = vunpack.c.l.bf16 %v965
        %vm967 = vmand %vm930, %vm911
        %vm968 = vmand %vm967, %vm913
        %v969 = vsel %vm968, 1, 0
        %v970 = vlaneseq
        %v971 = vshrl.u32 %v970, 7
        %v972 = vsub.s32 0, %v971
        %v973 = vrot.slane %v969, %v972
        %vm974 = vcmp.eq.s32.totalorder %v973, 1
        %v975 = vsel %vm974, %v966, -3e+38
        %v977 = vrot.slane %v975, 4
        %v979 = vmax.f32 %v961, %v977
        %v981 = vrot.slane %v966, 4
        %v983 = vadd.f32 %v962, %v981
        %v984 = vcvt.s32.f32 %v969
        %v985 = vadd.f32 %v964, %v984
        %v986 = vld [vmem:[%s541 + $0x20] sm:$0x3]
        %v987 = vunpack.c.l.bf16 %v986
        %v988 = vadd.s32 %v861, 1
        %vm989 = vcmp.ge.s32.totalorder %v988, 0
        %vm990 = vcmp.lt.s32.totalorder %v988, 16
        %vm991 = vmand %vm989, %vm990
        %vm992 = vmand %vm991, %vm870
        %vm993 = vmand %vm992, %vm872
        %v994 = vsel %vm993, 1, 0
        %v995 = vlaneseq
        %v996 = vshrl.u32 %v995, 7
        %v997 = vsub.s32 0, %v996
        %v998 = vrot.slane %v994, %v997
        %vm999 = vcmp.eq.s32.totalorder %v998, 1
        %v1000 = vsel %vm999, %v987, -3e+38
        %v1001 = vmax.f32 %v979, %v1000
        %v1002 = vadd.f32 %v983, %v987
        %v1003 = vcvt.s32.f32 %v994
        %v1004 = vadd.f32 %v985, %v1003
        %v1005 = vld [vmem:[%s541 + $0x20] sm:$0xc]
        %v1006 = vunpack.c.l.bf16 %v1005
        %vm1007 = vmand %vm991, %vm887
        %vm1008 = vmand %vm1007, %vm889
        %v1009 = vsel %vm1008, 1, 0
        %v1010 = vlaneseq
        %v1011 = vshrl.u32 %v1010, 7
        %v1012 = vsub.s32 0, %v1011
        %v1013 = vrot.slane %v1009, %v1012
        %vm1014 = vcmp.eq.s32.totalorder %v1013, 1
        %v1015 = vsel %vm1014, %v1006, -3e+38
        %v1017 = vrot.slane %v1015, 4
        %v1019 = vmax.f32 %v1001, %v1017
        %v1021 = vrot.slane %v1006, 4
        %v1023 = vadd.f32 %v1002, %v1021
        %v1024 = vcvt.s32.f32 %v1009
        %v1025 = vadd.f32 %v1004, %v1024
        %v1026 = vld [vmem:[%s541 + $0x24] sm:$0x3]
        %v1027 = vunpack.c.l.bf16 %v1026
        %vm1028 = vmand %vm991, %vm911
        %vm1029 = vmand %vm1028, %vm913
        %v1030 = vsel %vm1029, 1, 0
        %v1031 = vlaneseq
        %v1032 = vshrl.u32 %v1031, 7
        %v1033 = vsub.s32 0, %v1032
        %v1034 = vrot.slane %v1030, %v1033
        %vm1035 = vcmp.eq.s32.totalorder %v1034, 1
        %v1036 = vsel %vm1035, %v1027, -3e+38
        %v1037 = vmax.f32 %v1019, %v1036
        %v1038 = vadd.f32 %v1023, %v1027
        %v1039 = vcvt.s32.f32 %v1030
        %v1040 = vadd.f32 %v1025, %v1039
        %v1041 = vlaneseq
        %v1042 = vshrl.u32 %v1041, 7
        %v1043 = vsub.s32 0, %v1042
        %v1044 = vrot.slane %v1040, %v1043
        %v1045 = vrcp.pop %v1044
        %v1046 = vmul.f32 %v1038, %v1045
        %v1047 = vld [vmem:[%s606] sm:$0xf]
        %s1048 = sld [smem:[#allocation4]]
        %v1049 = vstv %s1048
        %v1050 = vmul.f32 %v1049, %v1037
        %v1051 = vadd.f32 %v856, %v1050
        %s1052 = sld [smem:[#allocation4 + $0x1]]
        %v1053 = vstv %s1052
        %v1054 = vmul.f32 %v1053, %v1046
        %v1055 = vadd.f32 %v1051, %v1054
        %s1056 = sld [smem:[#allocation4 + $0x2]]
        %v1057 = vstv %s1056
        %v1058 = vmul.f32 %v1057, %v1047
        %v1059 = vadd.f32 %v1055, %v1058
        %1060 = vst [vmem:[%s614] sm:$0xf] %v1059
        %p1061 = scmp.lt.s32.totalorder %s23, 3
        %s1062 = scalar_select %p1061, %s23, 3
        %s1063 = smul.addr %s1062, 4
        %s1064 = scalar_lea.vmem %s9, %s1063
        %p1065 = scmp.lt.s32.totalorder %s23, 3
        %s1066 = scalar_select %p1065, %s23, 3
        %s1067 = smul.addr %s1066, 4
        %s1068 = scalar_lea.vmem %s10, %s1067
        // Predicated region
        $region143: #{_lambda_.2} parent=129 // pred_check
          %p1069 = pneg %p250
        $region144: #{_lambda_.2} parent=129 // pred_check_branch
          %1071 = sbr.rel (%p1069) target = $region146
        $region145: #{_lambda_.2} parent=129 // pred_region
          _
        $region146: #{_lambda_.2} parent=129 // pred_fallthru
          _
        // Predicated region
        $region147: #{_lambda_.2} parent=129 // pred_check
          %p1072 = pneg %p276
        $region148: #{_lambda_.2} parent=129 // pred_check_branch
          %1074 = sbr.rel (%p1072) target = $region150
        $region149: #{_lambda_.2} parent=129 // pred_region
          _
        $region150: #{_lambda_.2} parent=129 // pred_fallthru
          _
      $region130: #{_lambda_.2} parent=5 // pred_fallthru
        _
      %p1075 = scmp.le.s32.totalorder 2, %s18
      // Predicated region
      $region151: #{_lambda_.2} parent=5 // pred_check
        %p1076 = pneg %p1075
      $region152: #{_lambda_.2} parent=5 // pred_check_branch
        %1078 = sbr.rel (%p1076) target = $region154
      $region153: #{_lambda_.2} parent=5 // pred_region
        %s1079 = ssub.s32 %s18, 2
        // Predicated region
        $region155: #{_lambda_.2} parent=153 // pred_check
          %p1080 = pneg %p256
        $region156: #{_lambda_.2} parent=153 // pred_check_branch
          %1082 = sbr.rel (%p1080) target = $region158
        $region157: #{_lambda_.2} parent=153 // pred_region
          %p1083 = scmp.lt.s32.totalorder %s24, 3
          %s1084 = scalar_select %p1083, %s24, 3
          %s1085 = smul.addr %s1084, 4
          %s1086 = scalar_lea.vmem %s9, %s1085
        $region158: #{_lambda_.2} parent=153 // pred_fallthru
          _
        // Predicated region
        $region159: #{_lambda_.2} parent=153 // pred_check
          %p1087 = pneg %p282
        $region160: #{_lambda_.2} parent=153 // pred_check_branch
          %1089 = sbr.rel (%p1087) target = $region162
        $region161: #{_lambda_.2} parent=153 // pred_region
          %p1090 = scmp.lt.s32.totalorder %s24, 3
          %s1091 = scalar_select %p1090, %s24, 3
          %s1092 = smul.addr %s1091, 4
          %s1093 = scalar_lea.vmem %s10, %s1092
        $region162: #{_lambda_.2} parent=153 // pred_fallthru
          _
      $region154: #{_lambda_.2} parent=5 // pred_fallthru
        _
    $region6: #{_lambda_.2} parent=1 // loop_footer
      %s22 = sadd.s32 1, %s18
    $region7: #{_lambda_.2} parent=1 // loop_footer_branch
      %17 = sbr.rel target = $region3
    $region8: #{_lambda_.2} parent=1 // loop_exit
      _
    %1094 = vsyncpa [#allocation5], 1
    %s1095 = scalar_lea.sflag [#allocation5], 1
    %1096 = vsyncpa %s1095, 1

// kernel: _lambda_.3
$region0: #{_lambda_.3}
  #allocation0 [shape = 'u32[]', space=smem, size = 0x4, offset = 0x4, fixed_abs, tag = 'smem constant byte address 0x4 - core index']
  #allocation1 [shape = 'u32[144,128]{1,0:T(1,128)}', space=vmem, size = 0x12000, scoped, tag = 'internal scratch']
  %s0 = inlined_call_operand.vmem [shape: bf16[136,512], index: 0, kind: input, shape index: {}]
  %s1 = inlined_call_operand.vmem [shape: bf16[4,136], index: 1, kind: input, shape index: {}]
  %s2 = inlined_call_operand.vmem [shape: f32[4,1], index: 2, kind: input, shape index: {}]
  %s3 = inlined_call_operand.vmem [shape: f32[4,512], index: 3, kind: input, shape index: {}, may-alias: {3,4}]
  %s4 = inlined_call_operand.vmem [shape: f32[4,512], index: 4, kind: output, shape index: {}, may-alias: {3,4}]
  %s5 = sld [smem:[#allocation0]]
  $region90: #{_lambda_.3} parent=0
    _
  %s7 = ssub.s32 1, %s5
  %s8 = scalar_select 0, %s7, %s5
  $region1: #{_lambda_.3} parent=0
    #allocation2 [shape = 'u8[69632]{0}', space=vmem, size = 0x11000, scoped, tag = 'input window, operand 0']
    loop: start=0, step=1, limit=6
    $region2: #{_lambda_.3} parent=1 // loop_pre_header
      _
    $region3: #{_lambda_.3} parent=1 // loop_header
      %s10 = sphi 0, %s14
      %p11 = scmp.ge.s32.totalorder %s10, 6
      %s20 = sphi 0, %s22
      %s23 = sphi 0, %s20
      %s24 = sphi 0, %s23
      %s40 = sphi 0, %s24
      %s44 = sphi 0, %s44
      %s46 = sphi 0, %s44
      %s47 = sphi 0, %s46
      %s61 = sphi 0, %s47
      %s65 = sphi 0, %s65
      %s67 = sphi 0, %s65
      %s68 = sphi 0, %s67
      %s82 = sphi 0, %s68
      %s88 = sphi 0, %s90
      %s91 = sphi 0, %s88
      %s92 = sphi 0, %s91
      %s108 = sphi 0, %s92
      %s114 = sphi 0, %s116
      %s117 = sphi 0, %s114
      %s118 = sphi 0, %s117
      %s134 = sphi 0, %s118
    $region4: #{_lambda_.3} parent=1 // loop_header_branch
      %13 = sbr.rel (%p11) target = $region8
    $region5: #{_lambda_.3} parent=1 // loop_body
      %s15 = ssub.s32 %s10, 1
      %s16 = ssub.s32 %s10, 2
      %s17 = sadd.s32 %s10, 1
      %s18 = ssub.s32 %s10, %s17
      %p19 = scmp.eq.s32.totalorder %s18, 0
      %s21 = sadd.s32 %s20, 1
      %s22 = scalar_select %p19, %s20, %s21
      %p25 = pneg %p19
      %p26 = scmp.eq.s32.totalorder %s10, 3
      %p27 = por %p25, %p26
      %p28 = scmp.ne.s32.totalorder %s20, %s23
      %p29 = scmp.eq.s32.totalorder %s10, 0
      %p30 = por %p28, %p29
      %p31 = scmp.ne.s32.totalorder %s20, %s23
      %p32 = scmp.eq.s32.totalorder %s15, 3
      %p33 = por %p31, %p32
      %p34 = scmp.ne.s32.totalorder %s23, %s24
      %p35 = scmp.eq.s32.totalorder %s15, 0
      %p36 = por %p34, %p35
      %p37 = scmp.ne.s32.totalorder %s23, %s24
      %p38 = scmp.eq.s32.totalorder %s16, 3
      %p39 = por %p37, %p38
      %p41 = scmp.ne.s32.totalorder %s24, %s40
      %p42 = scmp.eq.s32.totalorder %s16, 0
      %p43 = por %p41, %p42
      %s45 = sadd.s32 %s44, 1
      %p48 = scmp.eq.s32.totalorder %s10, 3
      %p49 = scmp.ne.s32.totalorder %s44, %s46
      %p50 = scmp.eq.s32.totalorder %s10, 0
      %p51 = por %p49, %p50
      %p52 = scmp.ne.s32.totalorder %s44, %s46
      %p53 = scmp.eq.s32.totalorder %s15, 3
      %p54 = por %p52, %p53
      %p55 = scmp.ne.s32.totalorder %s46, %s47
      %p56 = scmp.eq.s32.totalorder %s15, 0
      %p57 = por %p55, %p56
      %p58 = scmp.ne.s32.totalorder %s46, %s47
      %p59 = scmp.eq.s32.totalorder %s16, 3
      %p60 = por %p58, %p59
      %p62 = scmp.ne.s32.totalorder %s47, %s61
      %p63 = scmp.eq.s32.totalorder %s16, 0
      %p64 = por %p62, %p63
      %s66 = sadd.s32 %s65, 1
      %p69 = scmp.eq.s32.totalorder %s10, 3
      %p70 = scmp.ne.s32.totalorder %s65, %s67
      %p71 = scmp.eq.s32.totalorder %s10, 0
      %p72 = por %p70, %p71
      %p73 = scmp.ne.s32.totalorder %s65, %s67
      %p74 = scmp.eq.s32.totalorder %s15, 3
      %p75 = por %p73, %p74
      %p76 = scmp.ne.s32.totalorder %s67, %s68
      %p77 = scmp.eq.s32.totalorder %s15, 0
      %p78 = por %p76, %p77
      %p79 = scmp.ne.s32.totalorder %s67, %s68
      %p80 = scmp.eq.s32.totalorder %s16, 3
      %p81 = por %p79, %p80
      %p83 = scmp.ne.s32.totalorder %s68, %s82
      %p84 = scmp.eq.s32.totalorder %s16, 0
      %p85 = por %p83, %p84
      %s86 = ssub.s32 %s10, %s17
      %p87 = scmp.eq.s32.totalorder %s86, 0
      %s89 = sadd.s32 %s88, 1
      %s90 = scalar_select %p87, %s88, %s89
      %p93 = pneg %p87
      %p94 = scmp.eq.s32.totalorder %s10, 3
      %p95 = por %p93, %p94
      %p96 = scmp.ne.s32.totalorder %s88, %s91
      %p97 = scmp.eq.s32.totalorder %s10, 0
      %p98 = por %p96, %p97
      %p99 = scmp.ne.s32.totalorder %s88, %s91
      %p100 = scmp.eq.s32.totalorder %s15, 3
      %p101 = por %p99, %p100
      %p102 = scmp.ne.s32.totalorder %s91, %s92
      %p103 = scmp.eq.s32.totalorder %s15, 0
      %p104 = por %p102, %p103
      %p105 = scmp.ne.s32.totalorder %s91, %s92
      %p106 = scmp.eq.s32.totalorder %s16, 3
      %p107 = por %p105, %p106
      %p109 = scmp.ne.s32.totalorder %s92, %s108
      %p110 = scmp.eq.s32.totalorder %s16, 0
      %p111 = por %p109, %p110
      %s112 = ssub.s32 %s10, %s17
      %p113 = scmp.eq.s32.totalorder %s112, 0
      %s115 = sadd.s32 %s114, 1
      %s116 = scalar_select %p113, %s114, %s115
      %p119 = pneg %p113
      %p120 = scmp.eq.s32.totalorder %s10, 3
      %p121 = por %p119, %p120
      %p122 = scmp.ne.s32.totalorder %s114, %s117
      %p123 = scmp.eq.s32.totalorder %s10, 0
      %p124 = por %p122, %p123
      %p125 = scmp.ne.s32.totalorder %s114, %s117
      %p126 = scmp.eq.s32.totalorder %s15, 3
      %p127 = por %p125, %p126
      %p128 = scmp.ne.s32.totalorder %s117, %s118
      %p129 = scmp.eq.s32.totalorder %s15, 0
      %p130 = por %p128, %p129
      %p131 = scmp.ne.s32.totalorder %s117, %s118
      %p132 = scmp.eq.s32.totalorder %s16, 3
      %p133 = por %p131, %p132
      %p135 = scmp.ne.s32.totalorder %s118, %s134
      %p136 = scmp.eq.s32.totalorder %s16, 0
      %p137 = por %p135, %p136
      %p138 = scmp.le.s32.totalorder 1, %s10
      %p139 = scmp.lt.s32.totalorder %s10, 5
      %p140 = pnand %p138, %p139
      %p141 = pneg %p140
      // Predicated region
      $region9: #{_lambda_.3} parent=5 // pred_check
        _
      $region10: #{_lambda_.3} parent=5 // pred_check_branch
        %143 = sbr.rel (%p140) target = $region12
      $region11: #{_lambda_.3} parent=5 // pred_region
        %s144 = ssub.s32 %s10, 1
        // Predicated region
        $region13: #{_lambda_.3} parent=11 // pred_check
          %p145 = pneg %p57
        $region14: #{_lambda_.3} parent=11 // pred_check_branch
          %147 = sbr.rel (%p145) target = $region16
        $region15: #{_lambda_.3} parent=11 // pred_region
          _
        $region16: #{_lambda_.3} parent=11 // pred_fallthru
          _
        // Predicated region
        $region17: #{_lambda_.3} parent=11 // pred_check
          %p148 = pneg %p78
        $region18: #{_lambda_.3} parent=11 // pred_check_branch
          %150 = sbr.rel (%p148) target = $region20
        $region19: #{_lambda_.3} parent=11 // pred_region
          _
        $region20: #{_lambda_.3} parent=11 // pred_fallthru
          _
      $region12: #{_lambda_.3} parent=5 // pred_fallthru
        _
      %p151 = scmp.lt.s32.totalorder %s10, 4
      // Predicated region
      $region21: #{_lambda_.3} parent=5 // pred_check
        %p152 = pneg %p151
      $region22: #{_lambda_.3} parent=5 // pred_check_branch
        %154 = sbr.rel (%p152) target = $region24
      $region23: #{_lambda_.3} parent=5 // pred_region
        // Predicated region
        $region25: #{_lambda_.3} parent=23 // pred_check
          %p155 = pneg %p30
        $region26: #{_lambda_.3} parent=23 // pred_check_branch
          %157 = sbr.rel (%p155) target = $region28
        $region27: #{_lambda_.3} parent=23 // pred_region
          %s158 = sand.u32 %s20, 1
          %s159 = sand.u32 %s20, 1
          %s160 = smul.addr %s159, 68
          %s161 = scalar_lea.vmem [#allocation2], %s160
          %s162 = smul.addr %s10, 4
          %s163 = scalar_lea.vmem %s0, %s162
          // Predicated region
          $region29: #{_lambda_.3} parent=27 // pred_check
            _
          $region30: #{_lambda_.3} parent=27 // pred_check_branch
            %165 = sbr.rel (0) target = $region32
          $region31: #{_lambda_.3} parent=27 // pred_region
            // Predicated region
            $region33: #{_lambda_.3} parent=31 // pred_check
              _
            $region34: #{_lambda_.3} parent=31 // pred_check_branch
              %167 = sbr.rel target = $region36
            $region35: #{_lambda_.3} parent=31 // pred_region
              // Predicated region
              $region48: #{_lambda_.3} parent=35 // pred_check
                _
              $region49: #{_lambda_.3} parent=35 // pred_check_branch
                %215 = sbr.rel (0) target = $region51
              $region50: #{_lambda_.3} parent=35 // pred_region
                loop: start=0, step=1, limit=1
                $region52: #{_lambda_.3} parent=50 // loop_pre_header
                  _
                $region53: #{_lambda_.3} parent=50 // loop_header
                  %s217 = sphi 0, %s221
                  %p218 = scmp.ge.s32.totalorder %s217, 1
                  %s222 = sphi %s163, %s163
                  %s223 = sphi %s161, %s161
                $region54: #{_lambda_.3} parent=50 // loop_header_branch
                  %220 = sbr.rel (%p218) target = $region58
                $region55: #{_lambda_.3} parent=50 // loop_body
                  _
                $region56: #{_lambda_.3} parent=50 // loop_footer
                  %s221 = sadd.s32 1, %s217
                $region57: #{_lambda_.3} parent=50 // loop_footer_branch
                  %216 = sbr.rel target = $region53
                $region58: #{_lambda_.3} parent=50 // loop_exit
                  _
                %s225 = ssub.s32 16, 1
                loop: start=0, step=1, limit=1
                $region59: #{_lambda_.3} parent=50 // loop_pre_header
                  _
                $region60: #{_lambda_.3} parent=50 // loop_header
                  %s227 = sphi 0, %s231
                  %p228 = scmp.ge.s32.totalorder %s227, 1
                  %s232 = sphi %s163, %s163
                  %s233 = sphi %s161, %s161
                $region61: #{_lambda_.3} parent=50 // loop_header_branch
                  %230 = sbr.rel (%p228) target = $region65
                $region62: #{_lambda_.3} parent=50 // loop_body
                  %v234 = vld [vmem:[%s232] sm:%s225]
                  %235 = vst [vmem:[%s233] sm:%s225] %v234
                  %v236 = vld [vmem:[%s232 + $0x10] sm:%s225]
                  %237 = vst [vmem:[%s233 + $0x4] sm:%s225] %v236
                  %v238 = vld [vmem:[%s232 + $0x20] sm:%s225]
                  %239 = vst [vmem:[%s233 + $0x8] sm:%s225] %v238
                  %v240 = vld [vmem:[%s232 + $0x30] sm:%s225]
                  %241 = vst [vmem:[%s233 + $0xc] sm:%s225] %v240
                  %v242 = vld [vmem:[%s232 + $0x40] sm:%s225]
                  %243 = vst [vmem:[%s233 + $0x10] sm:%s225] %v242
                  %v244 = vld [vmem:[%s232 + $0x50] sm:%s225]
                  %245 = vst [vmem:[%s233 + $0x14] sm:%s225] %v244
                  %v246 = vld [vmem:[%s232 + $0x60] sm:%s225]
                  %247 = vst [vmem:[%s233 + $0x18] sm:%s225] %v246
                  %v248 = vld [vmem:[%s232 + $0x70] sm:%s225]
                  %249 = vst [vmem:[%s233 + $0x1c] sm:%s225] %v248
                  %v250 = vld [vmem:[%s232 + $0x80] sm:%s225]
                  %251 = vst [vmem:[%s233 + $0x20] sm:%s225] %v250
                  %v252 = vld [vmem:[%s232 + $0x90] sm:%s225]
                  %253 = vst [vmem:[%s233 + $0x24] sm:%s225] %v252
                  %v254 = vld [vmem:[%s232 + $0xa0] sm:%s225]
                  %255 = vst [vmem:[%s233 + $0x28] sm:%s225] %v254
                  %v256 = vld [vmem:[%s232 + $0xb0] sm:%s225]
                  %257 = vst [vmem:[%s233 + $0x2c] sm:%s225] %v256
                  %v258 = vld [vmem:[%s232 + $0xc0] sm:%s225]
                  %259 = vst [vmem:[%s233 + $0x30] sm:%s225] %v258
                  %v260 = vld [vmem:[%s232 + $0xd0] sm:%s225]
                  %261 = vst [vmem:[%s233 + $0x34] sm:%s225] %v260
                  %v262 = vld [vmem:[%s232 + $0xe0] sm:%s225]
                  %263 = vst [vmem:[%s233 + $0x38] sm:%s225] %v262
                  %v264 = vld [vmem:[%s232 + $0xf0] sm:%s225]
                  %265 = vst [vmem:[%s233 + $0x3c] sm:%s225] %v264
                  %v266 = vld [vmem:[%s232 + $0x100] sm:%s225]
                  %267 = vst [vmem:[%s233 + $0x40] sm:%s225] %v266
                $region63: #{_lambda_.3} parent=50 // loop_footer
                  %s231 = sadd.s32 1, %s227
                $region64: #{_lambda_.3} parent=50 // loop_footer_branch
                  %226 = sbr.rel target = $region60
                $region65: #{_lambda_.3} parent=50 // loop_exit
                  _
              $region51: #{_lambda_.3} parent=35 // pred_fallthru
                _
            $region36: #{_lambda_.3} parent=31 // pred_fallthru
              _
            // Predicated region
            $region37: #{_lambda_.3} parent=31 // pred_check
              _
            $region38: #{_lambda_.3} parent=31 // pred_check_branch
              %169 = sbr.rel (0) target = $region40
            $region39: #{_lambda_.3} parent=31 // pred_region
              %s171 = ssub.s32 16, 1
              loop: start=0, step=1, limit=1
              $region41: #{_lambda_.3} parent=39 // loop_pre_header
                _
              $region42: #{_lambda_.3} parent=39 // loop_header
                %s173 = sphi 0, %s177
                %p174 = scmp.ge.s32.totalorder %s173, 1
                %s178 = sphi %s163, %s163
                %s179 = sphi %s161, %s161
              $region43: #{_lambda_.3} parent=39 // loop_header_branch
                %176 = sbr.rel (%p174) target = $region47
              $region44: #{_lambda_.3} parent=39 // loop_body
                %v180 = vld [vmem:[%s178] sm:%s171]
                %181 = vst [vmem:[%s179] sm:%s171] %v180
                %v182 = vld [vmem:[%s178 + $0x10] sm:%s171]
                %183 = vst [vmem:[%s179 + $0x4] sm:%s171] %v182
                %v184 = vld [vmem:[%s178 + $0x20] sm:%s171]
                %185 = vst [vmem:[%s179 + $0x8] sm:%s171] %v184
                %v186 = vld [vmem:[%s178 + $0x30] sm:%s171]
                %187 = vst [vmem:[%s179 + $0xc] sm:%s171] %v186
                %v188 = vld [vmem:[%s178 + $0x40] sm:%s171]
                %189 = vst [vmem:[%s179 + $0x10] sm:%s171] %v188
                %v190 = vld [vmem:[%s178 + $0x50] sm:%s171]
                %191 = vst [vmem:[%s179 + $0x14] sm:%s171] %v190
                %v192 = vld [vmem:[%s178 + $0x60] sm:%s171]
                %193 = vst [vmem:[%s179 + $0x18] sm:%s171] %v192
                %v194 = vld [vmem:[%s178 + $0x70] sm:%s171]
                %195 = vst [vmem:[%s179 + $0x1c] sm:%s171] %v194
                %v196 = vld [vmem:[%s178 + $0x80] sm:%s171]
                %197 = vst [vmem:[%s179 + $0x20] sm:%s171] %v196
                %v198 = vld [vmem:[%s178 + $0x90] sm:%s171]
                %199 = vst [vmem:[%s179 + $0x24] sm:%s171] %v198
                %v200 = vld [vmem:[%s178 + $0xa0] sm:%s171]
                %201 = vst [vmem:[%s179 + $0x28] sm:%s171] %v200
                %v202 = vld [vmem:[%s178 + $0xb0] sm:%s171]
                %203 = vst [vmem:[%s179 + $0x2c] sm:%s171] %v202
                %v204 = vld [vmem:[%s178 + $0xc0] sm:%s171]
                %205 = vst [vmem:[%s179 + $0x30] sm:%s171] %v204
                %v206 = vld [vmem:[%s178 + $0xd0] sm:%s171]
                %207 = vst [vmem:[%s179 + $0x34] sm:%s171] %v206
                %v208 = vld [vmem:[%s178 + $0xe0] sm:%s171]
                %209 = vst [vmem:[%s179 + $0x38] sm:%s171] %v208
                %v210 = vld [vmem:[%s178 + $0xf0] sm:%s171]
                %211 = vst [vmem:[%s179 + $0x3c] sm:%s171] %v210
                %v212 = vld [vmem:[%s178 + $0x100] sm:%s171]
                %213 = vst [vmem:[%s179 + $0x40] sm:%s171] %v212
              $region45: #{_lambda_.3} parent=39 // loop_footer
                %s177 = sadd.s32 1, %s173
              $region46: #{_lambda_.3} parent=39 // loop_footer_branch
                %172 = sbr.rel target = $region42
              $region47: #{_lambda_.3} parent=39 // loop_exit
                _
            $region40: #{_lambda_.3} parent=31 // pred_fallthru
              _
          $region32: #{_lambda_.3} parent=27 // pred_fallthru
            _
          %268 = vnop
        $region28: #{_lambda_.3} parent=23 // pred_fallthru
          _
        // Predicated region
        $region66: #{_lambda_.3} parent=23 // pred_check
          %p269 = pneg %p98
        $region67: #{_lambda_.3} parent=23 // pred_check_branch
          %271 = sbr.rel (%p269) target = $region69
        $region68: #{_lambda_.3} parent=23 // pred_region
          %p272 = scmp.lt.s32.totalorder %s10, 3
          %s273 = scalar_select %p272, %s10, 3
          %s274 = smul.addr %s273, 4
          %s275 = scalar_lea.vmem %s3, %s274
        $region69: #{_lambda_.3} parent=23 // pred_fallthru
          _
      $region24: #{_lambda_.3} parent=5 // pred_fallthru
        _
      %p276 = scmp.le.s32.totalorder 1, %s10
      %p277 = scmp.lt.s32.totalorder %s10, 5
      %p278 = pnand %p276, %p277
      %p279 = pneg %p278
      // Predicated region
      $region70: #{_lambda_.3} parent=5 // pred_check
        _
      $region71: #{_lambda_.3} parent=5 // pred_check_branch
        %281 = sbr.rel (%p278) target = $region73
      $region72: #{_lambda_.3} parent=5 // pred_region
        %s282 = ssub.s32 %s10, 1
        %s283 = sand.u32 %s23, 1
        %s284 = sand.u32 %s23, 1
        %s285 = smul.addr %s284, 68
        %s286 = scalar_lea.vmem [#allocation2], %s285
        // Predicated region
        $region74: #{_lambda_.3} parent=72 // pred_check
          %p287 = pneg %p36
        $region75: #{_lambda_.3} parent=72 // pred_check_branch
          %289 = sbr.rel (%p287) target = $region77
        $region76: #{_lambda_.3} parent=72 // pred_region
          _
        $region77: #{_lambda_.3} parent=72 // pred_fallthru
          _
        %s290 = sand.u32 %s23, 1
        %s291 = sand.u32 %s23, 1
        %s292 = smul.addr %s291, 68
        %s293 = scalar_lea.vmem [#allocation2], %s292
        %p294 = pneg %p36
        %p295 = pneg %p33
        %p296 = pneg %p57
        %p297 = pneg %p54
        %p298 = pneg %p78
        %p299 = pneg %p75
        %p300 = scmp.lt.s32.totalorder %s15, 3
        %s301 = scalar_select %p300, %s15, 3
        %s302 = smul.addr %s301, 4
        %s303 = scalar_lea.vmem %s3, %s302
        %p304 = pneg %p104
        %p305 = pneg %p101
        %p306 = pneg %p130
        %p307 = pneg %p127
        %p308 = scmp.lt.s32.totalorder %s15, 3
        %s309 = scalar_select %p308, %s15, 3
        %s310 = smul.addr %s309, 4
        %s311 = scalar_lea.vmem %s4, %s310
        %p312 = scmp.lt.s32.totalorder %s15, 3
        %s313 = scalar_select %p312, %s15, 3
        %s314 = smul.addr %s313, 4
        %s315 = scalar_lea.vmem %s3, %s314
        %p316 = scmp.lt.s32.totalorder %s15, 3
        %s317 = scalar_select %p316, %s15, 3
        %s318 = smul.addr %s317, 4
        %s319 = scalar_lea.vmem %s4, %s318
        %v321 = vld [vmem:[%s1] sm:$0xf]
        %v322 = vld [vmem:[%s286] sm:$0xf]
        %v323 = vld [vmem:[%s286 + $0x4] sm:$0xf]
        %v324 = vld [vmem:[%s286 + $0x8] sm:$0xf]
        %v325 = vld [vmem:[%s286 + $0xc] sm:$0xf]
        %v326 = vld [vmem:[%s286 + $0x10] sm:$0xf]
        %v327 = vld [vmem:[%s286 + $0x14] sm:$0xf]
        %v328 = vld [vmem:[%s286 + $0x18] sm:$0xf]
        %v329 = vld [vmem:[%s286 + $0x1c] sm:$0xf]
        %v330 = vld [vmem:[%s286 + $0x20] sm:$0xf]
        %v331 = vld [vmem:[%s286 + $0x24] sm:$0xf]
        %v332 = vld [vmem:[%s286 + $0x28] sm:$0xf]
        %v333 = vld [vmem:[%s286 + $0x2c] sm:$0xf]
        %v334 = vld [vmem:[%s286 + $0x30] sm:$0xf]
        %v335 = vld [vmem:[%s286 + $0x34] sm:$0xf]
        %v336 = vld [vmem:[%s286 + $0x38] sm:$0xf]
        %v337 = vld [vmem:[%s286 + $0x3c] sm:$0xf]
        %v338 = vld [vmem:[%s286 + $0x40] sm:$0xf]
        %v341 = vunpack.c.l.s4 1983009808
        %v342 = vunpack.c.0.s8 %v341
        %v343 = vlaneseq
        %v344 = vshrl.u32 %v343, 7
        %v345 = vsub.s32 %v342, %v344
        %v346 = vrot.slane %v321, %v345
        %v347 = vcombine.high %v346, %v346
        %v366 = vunpack.c.l.b16 %v322
        %v367 = vunpack.c.l.b16 %v323
        %v368 = vunpack.c.l.b16 %v324
        %v369 = vunpack.c.l.b16 %v325
        %v370 = vunpack.c.l.b16 %v326
        %v371 = vunpack.c.l.b16 %v327
        %v372 = vunpack.c.l.b16 %v328
        %v373 = vunpack.c.l.b16 %v329
        %v374 = vunpack.c.l.b16 %v330
        %v375 = vunpack.c.l.b16 %v331
        %v376 = vunpack.c.l.b16 %v332
        %v377 = vunpack.c.l.b16 %v333
        %v378 = vunpack.c.l.b16 %v334
        %v379 = vunpack.c.l.b16 %v335
        %v380 = vunpack.c.l.b16 %v336
        %v381 = vunpack.c.l.b16 %v337
        %v382 = vunpack.c.l.b16 %v338
        %v383 = vpack.c.b16 %v367, %v366
        %v384 = vpack.c.b16 %v369, %v368
        %v385 = vpack.c.b16 %v371, %v370
        %v386 = vpack.c.b16 %v373, %v372
        %v387 = vpack.c.b16 %v375, %v374
        %v388 = vpack.c.b16 %v377, %v376
        %v389 = vpack.c.b16 %v379, %v378
        %v390 = vpack.c.b16 %v381, %v380
        %v391 = vpack.c.b16 %v382, %v382
        %vm400 = vcmask 64512
        %v402 = vsel %vm400, %v347, 0
        %vm404 = vcmask 1043456
        %v406 = vsel %vm404, %v391, 0
        %408 = vmatprep.subr.bf16.mxu0 0
        %409 = vmatpush1.bf16.msra.mxu0 %v390
        %410 = vmatprep.subr.bf16.mxu0 0
        %411 = vmatpush1.bf16.msra.mxu0 %v389
        %412 = vmatprep.subr.bf16.mxu0 0
        %413 = vmatpush1.bf16.msra.mxu0 %v388
        %414 = vmatprep.subr.bf16.mxu0 0
        %415 = vmatpush1.bf16.msra.mxu0 %v387
        %416 = vmatprep.subr.bf16.mxu0 0
        %417 = vmatpush1.bf16.msra.mxu0 %v386
        %418 = vmatprep.subr.bf16.mxu0 0
        %419 = vmatpush1.bf16.msra.mxu0 %v385
        %420 = vmatprep.subr.bf16.mxu0 0
        %421 = vmatpush1.bf16.msra.mxu0 %v384
        %422 = vmatprep.subr.bf16.mxu0 0
        %423 = vmatpush1.bf16.msra.mxu0 %v383
        %424 = vmatprep.subr.bf16.mxu0 0
        %425 = vmatpush2.bf16.msra.mxu0 0
        %426 = vmatprep.subr.bf16.mxu0 0
        %427 = vmatpush2.bf16.msra.mxu0 0
        %428 = vmatprep.subr.bf16.mxu0 0
        %429 = vmatpush2.bf16.msra.mxu0 0
        %430 = vmatprep.subr.bf16.mxu0 0
        %431 = vmatpush2.bf16.msra.mxu0 0
        %432 = vmatprep.subr.bf16.mxu0 0
        %433 = vmatpush2.bf16.msra.mxu0 0
        %434 = vmatprep.subr.bf16.mxu0 0
        %435 = vmatpush2.bf16.msra.mxu0 0
        %436 = vmatprep.subr.bf16.mxu0 0
        %437 = vmatpush2.bf16.msra.mxu0 0
        %438 = vmatprep.subr.bf16.mxu0 0
        %439 = vmatpush2.bf16.msra.mxu0 %v406
        %440 = vmatprep.mubr.bf16.mxu0 %v402
        %441 = vmatmul.mubr.bf16.gmra.mxu0 %v346
        %v442 = vpop.f32.mrf.mxu0
        %v443 = vadd.f32 0.0, %v442
        %v444 = vpop.f32.mrf.mxu0
        %v445 = vpop.f32.mrf.mxu0
        %v446 = vpop.f32.mrf.mxu0
        %447 = vdwg.mxu0
        %v448 = vld [vmem:[%s315] sm:$0xf]
        %v449 = vadd.f32 %v448, %v443
        %v450 = vld [vmem:[%s2] sm:$0xf]
        %452 = vset.pattern.permute.xlu0 0
        %453 = vperm.xlu0 %452, %v450
        %v454 = vpop.permute.xlu0 %453
        %v456 = vadd.f32 %v449, %v454
        %457 = vst [vmem:[%s319] sm:$0xf] %v456
        %p458 = scmp.lt.s32.totalorder %s15, 3
        %s459 = scalar_select %p458, %s15, 3
        %s460 = smul.addr %s459, 4
        %s461 = scalar_lea.vmem %s4, %s460
        // Predicated region
        $region78: #{_lambda_.3} parent=72 // pred_check
          %p462 = pneg %p127
        $region79: #{_lambda_.3} parent=72 // pred_check_branch
          %464 = sbr.rel (%p462) target = $region81
        $region80: #{_lambda_.3} parent=72 // pred_region
          _
        $region81: #{_lambda_.3} parent=72 // pred_fallthru
          _
      $region73: #{_lambda_.3} parent=5 // pred_fallthru
        _
      %p465 = scmp.le.s32.totalorder 2, %s10
      // Predicated region
      $region82: #{_lambda_.3} parent=5 // pred_check
        %p466 = pneg %p465
      $region83: #{_lambda_.3} parent=5 // pred_check_branch
        %468 = sbr.rel (%p466) target = $region85
      $region84: #{_lambda_.3} parent=5 // pred_region
        %s469 = ssub.s32 %s10, 2
        // Predicated region
        $region86: #{_lambda_.3} parent=84 // pred_check
          %p470 = pneg %p133
        $region87: #{_lambda_.3} parent=84 // pred_check_branch
          %472 = sbr.rel (%p470) target = $region89
        $region88: #{_lambda_.3} parent=84 // pred_region
          %p473 = scmp.lt.s32.totalorder %s16, 3
          %s474 = scalar_select %p473, %s16, 3
          %s475 = smul.addr %s474, 4
          %s476 = scalar_lea.vmem %s4, %s475
        $region89: #{_lambda_.3} parent=84 // pred_fallthru
          _
      $region85: #{_lambda_.3} parent=5 // pred_fallthru
        _
    $region6: #{_lambda_.3} parent=1 // loop_footer
      %s14 = sadd.s32 1, %s10
    $region7: #{_lambda_.3} parent=1 // loop_footer_branch
      %9 = sbr.rel target = $region3
    $region8: #{_lambda_.3} parent=1 // loop_exit
      _

</llo_original>
